<compile_context>
chip_gen: v7x
topology: tpu7x:2x2x1
jax: 0.10.0
libtpu: 0.0.40
codegen_flags: <defaults>
</compile_context>

<pallas_src>
import functools

import jax
import jax.numpy as jnp
from jax.experimental import pallas as pl
from jax.experimental.pallas import tpu as pltpu


def _round_up(x, m):
    return ((x + m - 1) // m) * m


def _nbytes(x):
    return int(x.size) * x.dtype.itemsize


# -----------------------------------------------------------------------------
# One-time parameter preparation (hoisted out of the per-step path).
# -----------------------------------------------------------------------------
def prepare_decoder_params(w1, w2, w3, we2d, wih, whh, b_ih, b_hh, wout, bout,
                           *, embedding_size):
    """Pre-transpose / pad / fold / cast all decoder weights ONCE at model init.

    PyTorch Linear layout on input: (out_features, in_features).
    """
    H = whh.shape[1]
    C = w1.shape[0]
    V = wout.shape[0]
    emb = embedding_size
    Hp = _round_up(H, 128)     # each gate gets its own 128-lane block
    Vp = _round_up(V, 128)     # lane-dense logits

    def pad_gate_cols(w_t):    # (K, 4H) -> (K, 4Hp), zero-pad each gate block
        k = w_t.shape[0]
        w4 = w_t.reshape(k, 4, H)
        w4 = jnp.pad(w4, ((0, 0), (0, 0), (0, Hp - H)))
        return w4.reshape(k, 4 * Hp)

    wih_t = wih.T                                             # (emb+C, 4H)

    params = {
        # Attention weights used once per decode call (kept f32 for precision).
        "w2_t":  w2.T.astype(jnp.float32),                    # (E, C)
        "we2d_t": we2d.T.astype(jnp.float32),                 # (E, C)
        "w3_r":  w3.reshape(1, 1, C).astype(jnp.float32),     # (1, 1, C)
        # Per-step weights -> bf16 (fed to the MXU only).
        "w1_t": jnp.pad(w1.T, ((0, Hp - H), (0, 0))).astype(jnp.bfloat16),      # (Hp, C)
        "wih_emb_t": pad_gate_cols(wih_t[:emb]).astype(jnp.bfloat16),           # (emb, 4Hp)
        "wih_ctx_t": pad_gate_cols(wih_t[emb:]).astype(jnp.bfloat16),           # (C, 4Hp)
        "whh_t": pad_gate_cols(jnp.pad(whh.T, ((0, Hp - H), (0, 0)))
                               ).astype(jnp.bfloat16),                          # (Hp, 4Hp)
        "wout_t": jnp.pad(wout.T, ((0, Hp - H), (0, Vp - V))
                          ).astype(jnp.bfloat16),                               # (Hp, Vp)
        # Biases stay f32 (added on the VPU).
        "b_lstm": jnp.pad((b_ih + b_hh).reshape(4, H), ((0, 0), (0, Hp - H))
                          ).reshape(1, 4 * Hp).astype(jnp.float32),             # (1, 4Hp)
        "bout_r": jnp.pad(bout, (0, Vp - V)).reshape(1, Vp).astype(jnp.float32),  # (1, Vp)
    }
    return params


# -----------------------------------------------------------------------------
# Multi-step decode: the whole loop over decode steps runs inside ONE pallas_call.
# -----------------------------------------------------------------------------
@functools.partial(jax.jit, static_argnames=("vocab_size",))
def decoder_decode(params, inp_seq, enc_out_visual, hidden_state, cell_state,
                   *, vocab_size):
    """Run S decoder steps (teacher-forced embeddings) in a single fused kernel.

    inp_seq:        (B, S, embedding_size)
    enc_out_visual: (B, T, E)
    hidden_state:   (1, B, H)   cell_state: (1, B, H)
    Returns (logits (B, S, V), hidden (1, B, H), cell (1, B, H)).
    """
    B, S, emb = inp_seq.shape
    _, T, E = enc_out_visual.shape
    H = hidden_state.shape[-1]
    Hp = params["whh_t"].shape[0]
    C = params["w1_t"].shape[1]
    Vp = params["wout_t"].shape[1]
    V = vocab_size
    Bp = _round_up(B, 8)
    Tp = _round_up(T, 8)

    # ---- Padding (done once per decode call, exact math) ----
    inp_p = jnp.zeros((S, Bp, emb), jnp.bfloat16)
    inp_p = inp_p.at[:, :B, :].set(jnp.transpose(inp_seq, (1, 0, 2)).astype(jnp.bfloat16))
    enc_p = jnp.zeros((Bp, Tp, E), jnp.float32)
    enc_p = enc_p.at[:B, :T, :].set(enc_out_visual.astype(jnp.float32))
    h_p = jnp.zeros((Bp, Hp), jnp.float32).at[:B, :H].set(hidden_state[0].astype(jnp.float32))
    c_p = jnp.zeros((Bp, Hp), jnp.float32).at[:B, :H].set(cell_state[0].astype(jnp.float32))

    def kernel(inp_ref, enc_ref, h0_ref, c0_ref,
               w1_ref, w2_ref, w3_ref, we2d_ref,
               wih_emb_ref, wih_ctx_ref, whh_ref, b_ref, wout_ref, bout_ref,
               logits_ref, h_out_ref, c_out_ref,
               h_scr, c_scr, v2_scr, ed_scr):
        t = pl.program_id(0)

        # One-time work: load h/c carry, precompute loop-invariant encoder
        # projections (enc @ W2ᵀ and enc @ We2dᵀ) into resident VMEM scratch.
        @pl.when(t == 0)
        def _init():
            h_scr[...] = h0_ref[...]
            c_scr[...] = c0_ref[...]
            enc2 = enc_ref[...].reshape(Bp * Tp, E)     # Tp % 8 == 0 -> layout clean
            v2_scr[...] = jnp.dot(enc2, w2_ref[...],
                                  preferred_element_type=jnp.float32
                                  ).reshape(Bp, Tp, C)
            ed_scr[...] = jnp.dot(enc2, we2d_ref[...],
                                  preferred_element_type=jnp.float32
                                  ).reshape(Bp, Tp, C).astype(jnp.bfloat16)

        h = h_scr[...]                                   # (Bp, Hp) f32
        c = c_scr[...]
        h_bf = h.astype(jnp.bfloat16)

        # ---- Additive (Bahdanau) attention over all encoder timesteps ----
        v1 = jnp.dot(h_bf, w1_ref[...], preferred_element_type=jnp.float32)   # (Bp, C)
        e = jnp.tanh(v1[:, None, :] + v2_scr[...])                            # (Bp, Tp, C) f32
        scores = jnp.sum(e * w3_ref[...], axis=-1)                            # (Bp, Tp)
        if Tp != T:                                       # static; mask padded timesteps
            t_idx = jax.lax.broadcasted_iota(jnp.int32, (Bp, Tp), 1)
            scores = jnp.where(t_idx < T, scores, -1e30)
        scores = scores - jnp.max(scores, axis=-1, keepdims=True)
        pexp = jnp.exp(scores)
        denom = jnp.sum(pexp, axis=-1, keepdims=True)
        attn = pexp * pl.reciprocal(denom, approx=True)                       # (Bp, Tp)

        # Context: attn @ (enc @ We2dᵀ)  — batched MXU contraction, then tanh.
        ctx_pre = jax.lax.dot_general(
            attn.astype(jnp.bfloat16)[:, None, :], ed_scr[...],
            dimension_numbers=(((2,), (1,)), ((0,), (0,))),
            preferred_element_type=jnp.float32)                               # (Bp, 1, C)
        ctx = jnp.tanh(ctx_pre[:, 0, :])                                      # (Bp, C) f32

        # ---- LSTM cell: cat([emb, tanh(ctx)]) @ W_ih split into two dots ----
        gates = (jnp.dot(inp_ref[0], wih_emb_ref[...],
                         preferred_element_type=jnp.float32)
                 + jnp.dot(ctx.astype(jnp.bfloat16), wih_ctx_ref[...],
                           preferred_element_type=jnp.float32)
                 + jnp.dot(h_bf, whh_ref[...],
                           preferred_element_type=jnp.float32)
                 + b_ref[...])                                                # (Bp, 4Hp) f32
        # Each gate is a 128-lane-aligned block (no lane rotates).
        i_g = jax.nn.sigmoid(gates[:, 0 * Hp:1 * Hp])
        f_g = jax.nn.sigmoid(gates[:, 1 * Hp:2 * Hp])
        g_g = jnp.tanh(gates[:, 2 * Hp:3 * Hp])
        o_g = jax.nn.sigmoid(gates[:, 3 * Hp:4 * Hp])
        c_new = f_g * c + i_g * g_g
        h_new = o_g * jnp.tanh(c_new)

        # ---- Output projection (lane-dense Vp) ----
        logits_ref[0] = (jnp.dot(h_new.astype(jnp.bfloat16), wout_ref[...],
                                 preferred_element_type=jnp.float32)
                         + bout_ref[...]).astype(logits_ref.dtype)

        h_scr[...] = h_new
        c_scr[...] = c_new

        @pl.when(t == pl.num_programs(0) - 1)
        def _final():
            h_out_ref[...] = h_new
            c_out_ref[...] = c_new

    # ---- Cost estimate (advisory) ----
    flops = int(2 * Bp * Tp * E * C * 2
                + S * 2 * Bp * (Hp * C + Tp * C + C * 4 * Hp + emb * 4 * Hp
                                + Hp * 4 * Hp + Hp * Vp))
    transcendentals = int(S * Bp * (Tp * C + Tp + C + 5 * Hp))
    weight_arrays = [params[k] for k in ("w1_t", "w2_t", "w3_r", "we2d_t", "wih_emb_t",
                                         "wih_ctx_t", "whh_t", "b_lstm", "wout_t", "bout_r")]
    bytes_accessed = int(sum(_nbytes(a) for a in [inp_p, enc_p, h_p, c_p] + weight_arrays)
                         + S * Bp * Vp * 4 + 2 * Bp * Hp * 4)

    # Constant index_maps keep encoder output and ALL weights resident in VMEM
    # across the whole decode loop (DMA'd from HBM exactly once).
    const2 = lambda t: (0, 0)
    const3 = lambda t: (0, 0, 0)
    in_specs = [
        pl.BlockSpec((1, Bp, emb), lambda t: (t, 0, 0)),   # per-step embedding
        pl.BlockSpec((Bp, Tp, E), const3),                 # encoder outputs (resident)
        pl.BlockSpec((Bp, Hp), const2),                    # h0
        pl.BlockSpec((Bp, Hp), const2),                    # c0
        pl.BlockSpec((Hp, C), const2),                     # w1
        pl.BlockSpec((E, C), const2),                      # w2
        pl.BlockSpec((1, 1, C), const3),                   # w3
        pl.BlockSpec((E, C), const2),                      # we2d
        pl.BlockSpec((emb, 4 * Hp), const2),               # wih (embedding part)
        pl.BlockSpec((C, 4 * Hp), const2),                 # wih (context part)
        pl.BlockSpec((Hp, 4 * Hp), const2),                # whh
        pl.BlockSpec((1, 4 * Hp), const2),                 # folded lstm bias
        pl.BlockSpec((Hp, Vp), const2),                    # wout
        pl.BlockSpec((1, Vp), const2),                     # bout
    ]
    out_specs = [
        pl.BlockSpec((1, Bp, Vp), lambda t: (t, 0, 0)),    # logits per step
        pl.BlockSpec((Bp, Hp), const2),                    # final hidden
        pl.BlockSpec((Bp, Hp), const2),                    # final cell
    ]

    logits_p, h_out, c_out = pl.pallas_call(
        kernel,
        out_shape=(
            jax.ShapeDtypeStruct((S, Bp, Vp), jnp.float32),
            jax.ShapeDtypeStruct((Bp, Hp), jnp.float32),
            jax.ShapeDtypeStruct((Bp, Hp), jnp.float32),
        ),
        grid_spec=pltpu.PrefetchScalarGridSpec(
            num_scalar_prefetch=0,
            grid=(S,),
            in_specs=in_specs,
            out_specs=out_specs,
            scratch_shapes=[
                pltpu.VMEM((Bp, Hp), jnp.float32),          # h carry
                pltpu.VMEM((Bp, Hp), jnp.float32),          # c carry
                pltpu.VMEM((Bp, Tp, C), jnp.float32),       # enc @ W2ᵀ cache
                pltpu.VMEM((Bp, Tp, C), jnp.bfloat16),      # enc @ We2dᵀ cache
            ]),
        compiler_params=pltpu.CompilerParams(
            dimension_semantics=("arbitrary",)),            # sequential decode loop
        cost_estimate=pl.CostEstimate(
            flops=flops, transcendentals=transcendentals,
            bytes_accessed=bytes_accessed),
    )(inp_p, enc_p, h_p, c_p,
      params["w1_t"], params["w2_t"], params["w3_r"], params["we2d_t"],
      params["wih_emb_t"], params["wih_ctx_t"], params["whh_t"], params["b_lstm"],
      params["wout_t"], params["bout_r"])

    logits = jnp.transpose(logits_p[:, :B, :V], (1, 0, 2))   # (B, S, V)
    h_new = h_out[:B, :H][None]                               # (1, B, H)
    c_new = c_out[:B, :H][None]
    return logits, h_new, c_new


def decoder_forward(params, inp, enc_out_visual, hidden_state, cell_state, *, vocab_size):
    """Exactly the module's forward (one decode step, use_audio_modality=False)."""
    return decoder_decode(params, inp, enc_out_visual, hidden_state, cell_state,
                          vocab_size=vocab_size)


# -----------------------------------------------------------------------------
# Pure-JAX f32 reference (mirrors the PyTorch forward).
# -----------------------------------------------------------------------------
def _reference_step(inp, enc_out, h, c,
                    w1, w2, w3, we2d, wih, whh, b_ih, b_hh, wout, bout):
    H = h.shape[-1]
    v1 = h @ w1.T                                             # (B, C)
    v2 = jnp.einsum('bte,ce->btc', enc_out, w2)
    e = jnp.tanh(v1[:, None, :] + v2)
    scores = jnp.einsum('btc,oc->bto', e, w3)[..., 0]
    attn = jax.nn.softmax(scores, axis=-1)
    ctx_raw = jnp.einsum('bt,bte->be', attn, enc_out)
    vis_ctx = ctx_raw @ we2d.T
    x = jnp.concatenate([inp, jnp.tanh(vis_ctx)], axis=-1)
    gates = x @ wih.T + h @ whh.T + b_ih + b_hh
    i_g = jax.nn.sigmoid(gates[:, :H])
    f_g = jax.nn.sigmoid(gates[:, H:2 * H])
    g_g = jnp.tanh(gates[:, 2 * H:3 * H])
    o_g = jax.nn.sigmoid(gates[:, 3 * H:])
    c_new = f_g * c + i_g * g_g
    h_new = o_g * jnp.tanh(c_new)
    logits = h_new @ wout.T + bout
    return logits, h_new, c_new


if __name__ == "__main__":
    B, T_enc, H = 2, 8, 32        # batch, encoder seq len, decoder hidden_size
    emb, C = 16, 32               # embedding_size, context_size
    input_size = emb + C          # decoder_rnn input size
    E_vis = 64                    # encoder_output_size['visual']
    V = 128                       # vocab_size
    S = 4                         # decode steps for the fused multi-step call

    key = jax.random.PRNGKey(0)
    keys = jax.random.split(key, 15)

    inp_seq = jax.random.normal(keys[0], (B, S, emb), jnp.float32)
    enc_out = jax.random.normal(keys[1], (B, T_enc, E_vis), jnp.float32)
    h0 = jax.random.normal(keys[2], (1, B, H), jnp.float32)
    c0 = jax.random.normal(keys[3], (1, B, H), jnp.float32)

    def uni(k, shape, fan_in):
        b = 1.0 / jnp.sqrt(jnp.float32(fan_in))
        return jax.random.uniform(k, shape, jnp.float32, -b, b)

    # PyTorch Linear layout: (out_features, in_features)
    w1 = uni(keys[4], (C, H), H)              # visual_attention_weight_1
    w2 = uni(keys[5], (C, E_vis), E_vis)      # visual_attention_weight_2
    w3 = uni(keys[6], (1, C), C)              # visual_attention_weight_3
    we2d = uni(keys[7], (C, E_vis), E_vis)    # visual_enc_to_dec_mat
    wih = uni(keys[8], (4 * H, input_size), H)
    whh = uni(keys[9], (4 * H, H), H)
    b_ih = uni(keys[10], (4 * H,), H)
    b_hh = uni(keys[11], (4 * H,), H)
    wout = uni(keys[12], (V, H), H)           # output_layer[0]
    bout = uni(keys[13], (V,), H)

    # One-time weight prep (hoisted out of the per-step path).
    params = prepare_decoder_params(w1, w2, w3, we2d, wih, whh, b_ih, b_hh,
                                    wout, bout, embedding_size=emb)

    # Single-step call == module's decoder.forward.
    out1, h1, c1 = decoder_forward(params, inp_seq[:, :1, :], enc_out, h0, c0,
                                   vocab_size=V)
    out1, h1, c1 = jax.block_until_ready((out1, h1, c1))
    assert out1.shape == (B, 1, V), out1.shape
    assert h1.shape == (1, B, H) and c1.shape == (1, B, H)

    # Multi-step decode, whole loop inside one pallas_call.
    outS, hS, cS = decoder_decode(params, inp_seq, enc_out, h0, c0, vocab_size=V)
    outS, hS, cS = jax.block_until_ready((outS, hS, cS))
    assert outS.shape == (B, S, V), outS.shape

    # Pure-JAX f32 reference, S sequential steps.
    ref_logits = []
    h_ref, c_ref = h0[0], c0[0]
    for s in range(S):
        lg, h_ref, c_ref = _reference_step(inp_seq[:, s, :], enc_out, h_ref, c_ref,
                                           w1, w2, w3, we2d, wih, whh, b_ih, b_hh,
                                           wout, bout)
        ref_logits.append(lg)
    ref_logits = jnp.stack(ref_logits, axis=1)   # (B, S, V)

    # bf16 weights + approx reciprocal -> loosened tolerances (feedback note).
    tol = dict(atol=2e-2, rtol=2e-2)
    assert jnp.allclose(out1[:, 0, :], ref_logits[:, 0, :], **tol), "single-step logits mismatch"
    assert jnp.allclose(outS, ref_logits, **tol), "multi-step logits mismatch"
    assert jnp.allclose(hS[0], h_ref, **tol), "hidden mismatch vs reference"
    assert jnp.allclose(cS[0], c_ref, **tol), "cell mismatch vs reference"

    print("KERNEL_OK")
</pallas_src>

<mosaic_0001>
module attributes {stable_mosaic.version = 11 : i64} {
  func.func @kernel(%arg0: i32, %arg1: memref<1x8x16xbf16, #tpu.memory_space<vmem>>, %arg2: memref<8x8x64xf32, #tpu.memory_space<vmem>>, %arg3: memref<8x128xf32, #tpu.memory_space<vmem>>, %arg4: memref<8x128xf32, #tpu.memory_space<vmem>>, %arg5: memref<128x32xbf16, #tpu.memory_space<vmem>>, %arg6: memref<64x32xf32, #tpu.memory_space<vmem>>, %arg7: memref<1x1x32xf32, #tpu.memory_space<vmem>>, %arg8: memref<64x32xf32, #tpu.memory_space<vmem>>, %arg9: memref<16x512xbf16, #tpu.memory_space<vmem>>, %arg10: memref<32x512xbf16, #tpu.memory_space<vmem>>, %arg11: memref<128x512xbf16, #tpu.memory_space<vmem>>, %arg12: memref<1x512xf32, #tpu.memory_space<vmem>>, %arg13: memref<128x128xbf16, #tpu.memory_space<vmem>>, %arg14: memref<1x128xf32, #tpu.memory_space<vmem>>, %arg15: memref<1x8x128xf32, #tpu.memory_space<vmem>>, %arg16: memref<8x128xf32, #tpu.memory_space<vmem>>, %arg17: memref<8x128xf32, #tpu.memory_space<vmem>>, %arg18: memref<8x128xf32, #tpu.memory_space<vmem>>, %arg19: memref<8x128xf32, #tpu.memory_space<vmem>>, %arg20: memref<8x8x32xf32, #tpu.memory_space<vmem>>, %arg21: memref<8x8x32xbf16, #tpu.memory_space<vmem>>) attributes {dimension_semantics = [#tpu.dimension_semantics<arbitrary>], iteration_bounds = array<i64: 1>, scalar_prefetch = 0 : i64, scratch_operands = 4 : i64, tpu.core_type = #tpu.core_type<tc>, window_params = [{transform_indices = @transform_0, window_bounds = array<i64: 1, 8, 16>}, {pipeline_mode = #tpu.pipeline_mode<synchronous>, transform_indices = @transform_1, window_bounds = array<i64: 8, 8, 64>}, {pipeline_mode = #tpu.pipeline_mode<synchronous>, transform_indices = @transform_2, window_bounds = array<i64: 8, 128>}, {pipeline_mode = #tpu.pipeline_mode<synchronous>, transform_indices = @transform_3, window_bounds = array<i64: 8, 128>}, {pipeline_mode = #tpu.pipeline_mode<synchronous>, transform_indices = @transform_4, window_bounds = array<i64: 128, 32>}, {pipeline_mode = #tpu.pipeline_mode<synchronous>, transform_indices = @transform_5, window_bounds = array<i64: 64, 32>}, {pipeline_mode = #tpu.pipeline_mode<synchronous>, transform_indices = @transform_6, window_bounds = array<i64: 1, 1, 32>}, {pipeline_mode = #tpu.pipeline_mode<synchronous>, transform_indices = @transform_7, window_bounds = array<i64: 64, 32>}, {pipeline_mode = #tpu.pipeline_mode<synchronous>, transform_indices = @transform_8, window_bounds = array<i64: 16, 512>}, {pipeline_mode = #tpu.pipeline_mode<synchronous>, transform_indices = @transform_9, window_bounds = array<i64: 32, 512>}, {pipeline_mode = #tpu.pipeline_mode<synchronous>, transform_indices = @transform_10, window_bounds = array<i64: 128, 512>}, {pipeline_mode = #tpu.pipeline_mode<synchronous>, transform_indices = @transform_11, window_bounds = array<i64: 1, 512>}, {pipeline_mode = #tpu.pipeline_mode<synchronous>, transform_indices = @transform_12, window_bounds = array<i64: 128, 128>}, {pipeline_mode = #tpu.pipeline_mode<synchronous>, transform_indices = @transform_13, window_bounds = array<i64: 1, 128>}, {transform_indices = @transform_14, window_bounds = array<i64: 1, 8, 128>}, {pipeline_mode = #tpu.pipeline_mode<synchronous>, transform_indices = @transform_15, window_bounds = array<i64: 8, 128>}, {pipeline_mode = #tpu.pipeline_mode<synchronous>, transform_indices = @transform_16, window_bounds = array<i64: 8, 128>}]} {
    %c0_i32 = arith.constant 0 : i32
    %0 = arith.cmpi eq, %arg0, %c0_i32 : i32
    %1 = arith.extui %0 : i1 to i32
    %c0_i32_0 = arith.constant 0 : i32
    %2 = arith.cmpi ne, %1, %c0_i32_0 : i32
    scf.if %2 {
      %c0_50 = arith.constant 0 : index
      %c0_51 = arith.constant 0 : index
      %86 = vector.load %arg3[%c0_50, %c0_51] : memref<8x128xf32, #tpu.memory_space<vmem>>, vector<8x128xf32>
      %c0_52 = arith.constant 0 : index
      %c0_53 = arith.constant 0 : index
      %87 = vector.load %arg18[%c0_52, %c0_53] : memref<8x128xf32, #tpu.memory_space<vmem>>, vector<8x128xf32>
      tpu.vector_store %arg18[%c0_52, %c0_53], %86 {strides = array<i32>} : memref<8x128xf32, #tpu.memory_space<vmem>>, vector<8x128xf32>,
      %c0_54 = arith.constant 0 : index
      %c0_55 = arith.constant 0 : index
      %88 = vector.load %arg4[%c0_54, %c0_55] : memref<8x128xf32, #tpu.memory_space<vmem>>, vector<8x128xf32>
      %c0_56 = arith.constant 0 : index
      %c0_57 = arith.constant 0 : index
      %89 = vector.load %arg19[%c0_56, %c0_57] : memref<8x128xf32, #tpu.memory_space<vmem>>, vector<8x128xf32>
      tpu.vector_store %arg19[%c0_56, %c0_57], %88 {strides = array<i32>} : memref<8x128xf32, #tpu.memory_space<vmem>>, vector<8x128xf32>,
      %c0_58 = arith.constant 0 : index
      %c0_59 = arith.constant 0 : index
      %c0_60 = arith.constant 0 : index
      %90 = vector.load %arg2[%c0_58, %c0_59, %c0_60] : memref<8x8x64xf32, #tpu.memory_space<vmem>>, vector<8x8x64xf32>
      %91 = vector.shape_cast %90 : vector<8x8x64xf32> to vector<64x64xf32>
      %c0_61 = arith.constant 0 : index
      %c0_62 = arith.constant 0 : index
      %92 = vector.load %arg6[%c0_61, %c0_62] : memref<64x32xf32, #tpu.memory_space<vmem>>, vector<64x32xf32>
      %cst_63 = arith.constant dense<0.000000e+00> : vector<64x32xf32>
      %93 = tpu.matmul %91, %92, %cst_63 {dimension_numbers = #tpu.dot_dimension_numbers<[1], [0], [0], [1], [0, 0, 1, 1], [], []>} : vector<64x64xf32>, vector<64x32xf32>, vector<64x32xf32> -> vector<64x32xf32>
      %94 = vector.shape_cast %93 : vector<64x32xf32> to vector<8x8x32xf32>
      %c0_64 = arith.constant 0 : index
      %c0_65 = arith.constant 0 : index
      %c0_66 = arith.constant 0 : index
      %95 = vector.load %arg20[%c0_64, %c0_65, %c0_66] : memref<8x8x32xf32, #tpu.memory_space<vmem>>, vector<8x8x32xf32>
      tpu.vector_store %arg20[%c0_64, %c0_65, %c0_66], %94 {strides = array<i32>} : memref<8x8x32xf32, #tpu.memory_space<vmem>>, vector<8x8x32xf32>,
      %c0_67 = arith.constant 0 : index
      %c0_68 = arith.constant 0 : index
      %96 = vector.load %arg8[%c0_67, %c0_68] : memref<64x32xf32, #tpu.memory_space<vmem>>, vector<64x32xf32>
      %cst_69 = arith.constant dense<0.000000e+00> : vector<64x32xf32>
      %97 = tpu.matmul %91, %96, %cst_69 {dimension_numbers = #tpu.dot_dimension_numbers<[1], [0], [0], [1], [0, 0, 1, 1], [], []>} : vector<64x64xf32>, vector<64x32xf32>, vector<64x32xf32> -> vector<64x32xf32>
      %98 = vector.shape_cast %97 : vector<64x32xf32> to vector<8x8x32xf32>
      %99 = arith.truncf %98 : vector<8x8x32xf32> to vector<8x8x32xbf16>
      %c0_70 = arith.constant 0 : index
      %c0_71 = arith.constant 0 : index
      %c0_72 = arith.constant 0 : index
      %100 = vector.load %arg21[%c0_70, %c0_71, %c0_72] : memref<8x8x32xbf16, #tpu.memory_space<vmem>>, vector<8x8x32xbf16>
      tpu.vector_store %arg21[%c0_70, %c0_71, %c0_72], %99 {strides = array<i32>} : memref<8x8x32xbf16, #tpu.memory_space<vmem>>, vector<8x8x32xbf16>,
    } else {
    }
    %c0 = arith.constant 0 : index
    %c0_1 = arith.constant 0 : index
    %3 = vector.load %arg18[%c0, %c0_1] : memref<8x128xf32, #tpu.memory_space<vmem>>, vector<8x128xf32>
    %c0_2 = arith.constant 0 : index
    %c0_3 = arith.constant 0 : index
    %4 = vector.load %arg19[%c0_2, %c0_3] : memref<8x128xf32, #tpu.memory_space<vmem>>, vector<8x128xf32>
    %5 = arith.truncf %3 : vector<8x128xf32> to vector<8x128xbf16>
    %c0_4 = arith.constant 0 : index
    %c0_5 = arith.constant 0 : index
    %6 = vector.load %arg5[%c0_4, %c0_5] : memref<128x32xbf16, #tpu.memory_space<vmem>>, vector<128x32xbf16>
    %cst = arith.constant dense<0.000000e+00> : vector<8x32xf32>
    %7 = tpu.matmul %5, %6, %cst {dimension_numbers = #tpu.dot_dimension_numbers<[1], [0], [0], [1], [0, 0, 1, 1], [], []>} : vector<8x128xbf16>, vector<128x32xbf16>, vector<8x32xf32> -> vector<8x32xf32>
    %8 = vector.shape_cast %7 : vector<8x32xf32> to vector<8x1x32xf32>
    %c0_6 = arith.constant 0 : index
    %c0_7 = arith.constant 0 : index
    %c0_8 = arith.constant 0 : index
    %9 = vector.load %arg20[%c0_6, %c0_7, %c0_8] : memref<8x8x32xf32, #tpu.memory_space<vmem>>, vector<8x8x32xf32>
    %10 = vector.broadcast %8 : vector<8x1x32xf32> to vector<8x8x32xf32>
    %11 = arith.addf %10, %9 : vector<8x8x32xf32>
    %12 = math.tanh %11 : vector<8x8x32xf32>
    %c0_9 = arith.constant 0 : index
    %c0_10 = arith.constant 0 : index
    %c0_11 = arith.constant 0 : index
    %13 = vector.load %arg7[%c0_9, %c0_10, %c0_11] : memref<1x1x32xf32, #tpu.memory_space<vmem>>, vector<1x1x32xf32>
    %14 = vector.broadcast %13 : vector<1x1x32xf32> to vector<8x8x32xf32>
    %15 = arith.mulf %12, %14 : vector<8x8x32xf32>
    %cst_12 = arith.constant dense<0.000000e+00> : vector<8x8xf32>
    %16 = vector.multi_reduction <add>, %15, %cst_12 [2] : vector<8x8x32xf32> to vector<8x8xf32>
    %cst_13 = arith.constant dense<0xFF800000> : vector<8xf32>
    %17 = vector.multi_reduction <maximumf>, %16, %cst_13 [1] : vector<8x8xf32> to vector<8xf32>
    %18 = vector.shape_cast %17 : vector<8xf32> to vector<8x1xf32>
    %19 = vector.broadcast %18 : vector<8x1xf32> to vector<8x8xf32>
    %20 = arith.subf %16, %19 : vector<8x8xf32>
    %21 = math.exp %20 : vector<8x8xf32>
    %cst_14 = arith.constant dense<0.000000e+00> : vector<8xf32>
    %22 = vector.multi_reduction <add>, %21, %cst_14 [1] : vector<8x8xf32> to vector<8xf32>
    %23 = vector.shape_cast %22 : vector<8xf32> to vector<8x1xf32>
    %24 = tpu.reciprocal %23 {approx = true} : vector<8x1xf32> -> vector<8x1xf32>
    %25 = vector.broadcast %24 : vector<8x1xf32> to vector<8x8xf32>
    %26 = arith.mulf %21, %25 : vector<8x8xf32>
    %27 = arith.truncf %26 : vector<8x8xf32> to vector<8x8xbf16>
    %28 = vector.shape_cast %27 : vector<8x8xbf16> to vector<8x1x8xbf16>
    %c0_15 = arith.constant 0 : index
    %c0_16 = arith.constant 0 : index
    %c0_17 = arith.constant 0 : index
    %29 = vector.load %arg21[%c0_15, %c0_16, %c0_17] : memref<8x8x32xbf16, #tpu.memory_space<vmem>>, vector<8x8x32xbf16>
    %cst_18 = arith.constant dense<0.000000e+00> : vector<8x1x32xf32>
    %30 = tpu.matmul %28, %29, %cst_18 {dimension_numbers = #tpu.dot_dimension_numbers<[2], [1], [1], [2], [0, 0, 0, 1, 1, 2], [0], [0]>} : vector<8x1x8xbf16>, vector<8x8x32xbf16>, vector<8x1x32xf32> -> vector<8x1x32xf32>
    %31 = vector.shape_cast %30 : vector<8x1x32xf32> to vector<8x32xf32>
    %32 = math.tanh %31 : vector<8x32xf32>
    %c0_19 = arith.constant 0 : index
    %c0_20 = arith.constant 0 : index
    %c0_21 = arith.constant 0 : index
    %33 = vector.load %arg1[%c0_19, %c0_20, %c0_21] : memref<1x8x16xbf16, #tpu.memory_space<vmem>>, vector<1x8x16xbf16>
    %34 = vector.shape_cast %33 : vector<1x8x16xbf16> to vector<8x16xbf16>
    %c0_22 = arith.constant 0 : index
    %c0_23 = arith.constant 0 : index
    %35 = vector.load %arg9[%c0_22, %c0_23] : memref<16x512xbf16, #tpu.memory_space<vmem>>, vector<16x512xbf16>
    %cst_24 = arith.constant dense<0.000000e+00> : vector<8x512xf32>
    %36 = tpu.matmul %34, %35, %cst_24 {dimension_numbers = #tpu.dot_dimension_numbers<[1], [0], [0], [1], [0, 0, 1, 1], [], []>} : vector<8x16xbf16>, vector<16x512xbf16>, vector<8x512xf32> -> vector<8x512xf32>
    %37 = arith.truncf %32 : vector<8x32xf32> to vector<8x32xbf16>
    %c0_25 = arith.constant 0 : index
    %c0_26 = arith.constant 0 : index
    %38 = vector.load %arg10[%c0_25, %c0_26] : memref<32x512xbf16, #tpu.memory_space<vmem>>, vector<32x512xbf16>
    %cst_27 = arith.constant dense<0.000000e+00> : vector<8x512xf32>
    %39 = tpu.matmul %37, %38, %cst_27 {dimension_numbers = #tpu.dot_dimension_numbers<[1], [0], [0], [1], [0, 0, 1, 1], [], []>} : vector<8x32xbf16>, vector<32x512xbf16>, vector<8x512xf32> -> vector<8x512xf32>
    %40 = arith.addf %36, %39 : vector<8x512xf32>
    %c0_28 = arith.constant 0 : index
    %c0_29 = arith.constant 0 : index
    %41 = vector.load %arg11[%c0_28, %c0_29] : memref<128x512xbf16, #tpu.memory_space<vmem>>, vector<128x512xbf16>
    %cst_30 = arith.constant dense<0.000000e+00> : vector<8x512xf32>
    %42 = tpu.matmul %5, %41, %cst_30 {dimension_numbers = #tpu.dot_dimension_numbers<[1], [0], [0], [1], [0, 0, 1, 1], [], []>} : vector<8x128xbf16>, vector<128x512xbf16>, vector<8x512xf32> -> vector<8x512xf32>
    %43 = arith.addf %40, %42 : vector<8x512xf32>
    %c0_31 = arith.constant 0 : index
    %c0_32 = arith.constant 0 : index
    %44 = vector.load %arg12[%c0_31, %c0_32] : memref<1x512xf32, #tpu.memory_space<vmem>>, vector<1x512xf32>
    %45 = vector.broadcast %44 : vector<1x512xf32> to vector<8x512xf32>
    %46 = arith.addf %43, %45 : vector<8x512xf32>
    %47 = vector.extract_strided_slice %46 {offsets = [0, 0], sizes = [8, 128], strides = [1, 1]} : vector<8x512xf32> to vector<8x128xf32>
    %48 = arith.negf %47 : vector<8x128xf32>
    %49 = math.exp %48 : vector<8x128xf32>
    %cst_33 = arith.constant 1.000000e+00 : f32
    %50 = vector.broadcast %cst_33 : f32 to vector<8x128xf32>
    %51 = arith.addf %50, %49 : vector<8x128xf32>
    %52 = arith.divf %50, %51 : vector<8x128xf32>
    %53 = vector.extract_strided_slice %46 {offsets = [0, 128], sizes = [8, 128], strides = [1, 1]} : vector<8x512xf32> to vector<8x128xf32>
    %54 = arith.negf %53 : vector<8x128xf32>
    %55 = math.exp %54 : vector<8x128xf32>
    %cst_34 = arith.constant 1.000000e+00 : f32
    %56 = vector.broadcast %cst_34 : f32 to vector<8x128xf32>
    %57 = arith.addf %56, %55 : vector<8x128xf32>
    %58 = arith.divf %56, %57 : vector<8x128xf32>
    %59 = vector.extract_strided_slice %46 {offsets = [0, 256], sizes = [8, 128], strides = [1, 1]} : vector<8x512xf32> to vector<8x128xf32>
    %60 = math.tanh %59 : vector<8x128xf32>
    %61 = vector.extract_strided_slice %46 {offsets = [0, 384], sizes = [8, 128], strides = [1, 1]} : vector<8x512xf32> to vector<8x128xf32>
    %62 = arith.negf %61 : vector<8x128xf32>
    %63 = math.exp %62 : vector<8x128xf32>
    %cst_35 = arith.constant 1.000000e+00 : f32
    %64 = vector.broadcast %cst_35 : f32 to vector<8x128xf32>
    %65 = arith.addf %64, %63 : vector<8x128xf32>
    %66 = arith.divf %64, %65 : vector<8x128xf32>
    %67 = arith.mulf %58, %4 : vector<8x128xf32>
    %68 = arith.mulf %52, %60 : vector<8x128xf32>
    %69 = arith.addf %67, %68 : vector<8x128xf32>
    %70 = math.tanh %69 : vector<8x128xf32>
    %71 = arith.mulf %66, %70 : vector<8x128xf32>
    %72 = arith.truncf %71 : vector<8x128xf32> to vector<8x128xbf16>
    %c0_36 = arith.constant 0 : index
    %c0_37 = arith.constant 0 : index
    %73 = vector.load %arg13[%c0_36, %c0_37] : memref<128x128xbf16, #tpu.memory_space<vmem>>, vector<128x128xbf16>
    %cst_38 = arith.constant dense<0.000000e+00> : vector<8x128xf32>
    %74 = tpu.matmul %72, %73, %cst_38 {dimension_numbers = #tpu.dot_dimension_numbers<[1], [0], [0], [1], [0, 0, 1, 1], [], []>} : vector<8x128xbf16>, vector<128x128xbf16>, vector<8x128xf32> -> vector<8x128xf32>
    %c0_39 = arith.constant 0 : index
    %c0_40 = arith.constant 0 : index
    %75 = vector.load %arg14[%c0_39, %c0_40] : memref<1x128xf32, #tpu.memory_space<vmem>>, vector<1x128xf32>
    %76 = vector.broadcast %75 : vector<1x128xf32> to vector<8x128xf32>
    %77 = arith.addf %74, %76 : vector<8x128xf32>
    %c0_41 = arith.constant 0 : index
    %c0_42 = arith.constant 0 : index
    %c0_43 = arith.constant 0 : index
    %78 = vector.load %arg15[%c0_41, %c0_42, %c0_43] : memref<1x8x128xf32, #tpu.memory_space<vmem>>, vector<1x8x128xf32>
    %79 = vector.shape_cast %78 : vector<1x8x128xf32> to vector<8x128xf32>
    %80 = vector.shape_cast %77 : vector<8x128xf32> to vector<1x8x128xf32>
    tpu.vector_store %arg15[%c0_41, %c0_42, %c0_43], %80 {strides = array<i32>} : memref<1x8x128xf32, #tpu.memory_space<vmem>>, vector<1x8x128xf32>,
    %c0_44 = arith.constant 0 : index
    %c0_45 = arith.constant 0 : index
    %81 = vector.load %arg18[%c0_44, %c0_45] : memref<8x128xf32, #tpu.memory_space<vmem>>, vector<8x128xf32>
    tpu.vector_store %arg18[%c0_44, %c0_45], %71 {strides = array<i32>} : memref<8x128xf32, #tpu.memory_space<vmem>>, vector<8x128xf32>,
    %c0_46 = arith.constant 0 : index
    %c0_47 = arith.constant 0 : index
    %82 = vector.load %arg19[%c0_46, %c0_47] : memref<8x128xf32, #tpu.memory_space<vmem>>, vector<8x128xf32>
    tpu.vector_store %arg19[%c0_46, %c0_47], %69 {strides = array<i32>} : memref<8x128xf32, #tpu.memory_space<vmem>>, vector<8x128xf32>,
    %c0_i32_48 = arith.constant 0 : i32
    %83 = arith.cmpi eq, %arg0, %c0_i32_48 : i32
    %84 = arith.extui %83 : i1 to i32
    %c0_i32_49 = arith.constant 0 : i32
    %85 = arith.cmpi ne, %84, %c0_i32_49 : i32
    scf.if %85 {
      %c0_50 = arith.constant 0 : index
      %c0_51 = arith.constant 0 : index
      %86 = vector.load %arg16[%c0_50, %c0_51] : memref<8x128xf32, #tpu.memory_space<vmem>>, vector<8x128xf32>
      tpu.vector_store %arg16[%c0_50, %c0_51], %71 {strides = array<i32>} : memref<8x128xf32, #tpu.memory_space<vmem>>, vector<8x128xf32>,
      %c0_52 = arith.constant 0 : index
      %c0_53 = arith.constant 0 : index
      %87 = vector.load %arg17[%c0_52, %c0_53] : memref<8x128xf32, #tpu.memory_space<vmem>>, vector<8x128xf32>
      tpu.vector_store %arg17[%c0_52, %c0_53], %69 {strides = array<i32>} : memref<8x128xf32, #tpu.memory_space<vmem>>, vector<8x128xf32>,
    } else {
    }
    return
  }
  func.func @transform_0(%arg0: i32) -> (i32, i32, i32) {
    %c0_i32 = arith.constant 0 : i32
    %c0_i32_0 = arith.constant 0 : i32
    %c0_i32_1 = arith.constant 0 : i32
    return %arg0, %c0_i32, %c0_i32_0 : i32, i32, i32
  }
  func.func @transform_1(%arg0: i32) -> (i32, i32, i32) {
    %c0_i32 = arith.constant 0 : i32
    %c0_i32_0 = arith.constant 0 : i32
    %c0_i32_1 = arith.constant 0 : i32
    %c0_i32_2 = arith.constant 0 : i32
    return %c0_i32, %c0_i32_0, %c0_i32_1 : i32, i32, i32
  }
  func.func @transform_2(%arg0: i32) -> (i32, i32) {
    %c0_i32 = arith.constant 0 : i32
    %c0_i32_0 = arith.constant 0 : i32
    %c0_i32_1 = arith.constant 0 : i32
    return %c0_i32, %c0_i32_0 : i32, i32
  }
  func.func @transform_3(%arg0: i32) -> (i32, i32) {
    %c0_i32 = arith.constant 0 : i32
    %c0_i32_0 = arith.constant 0 : i32
    %c0_i32_1 = arith.constant 0 : i32
    return %c0_i32, %c0_i32_0 : i32, i32
  }
  func.func @transform_4(%arg0: i32) -> (i32, i32) {
    %c0_i32 = arith.constant 0 : i32
    %c0_i32_0 = arith.constant 0 : i32
    %c0_i32_1 = arith.constant 0 : i32
    return %c0_i32, %c0_i32_0 : i32, i32
  }
  func.func @transform_5(%arg0: i32) -> (i32, i32) {
    %c0_i32 = arith.constant 0 : i32
    %c0_i32_0 = arith.constant 0 : i32
    %c0_i32_1 = arith.constant 0 : i32
    return %c0_i32, %c0_i32_0 : i32, i32
  }
  func.func @transform_6(%arg0: i32) -> (i32, i32, i32) {
    %c0_i32 = arith.constant 0 : i32
    %c0_i32_0 = arith.constant 0 : i32
    %c0_i32_1 = arith.constant 0 : i32
    %c0_i32_2 = arith.constant 0 : i32
    return %c0_i32, %c0_i32_0, %c0_i32_1 : i32, i32, i32
  }
  func.func @transform_7(%arg0: i32) -> (i32, i32) {
    %c0_i32 = arith.constant 0 : i32
    %c0_i32_0 = arith.constant 0 : i32
    %c0_i32_1 = arith.constant 0 : i32
    return %c0_i32, %c0_i32_0 : i32, i32
  }
  func.func @transform_8(%arg0: i32) -> (i32, i32) {
    %c0_i32 = arith.constant 0 : i32
    %c0_i32_0 = arith.constant 0 : i32
    %c0_i32_1 = arith.constant 0 : i32
    return %c0_i32, %c0_i32_0 : i32, i32
  }
  func.func @transform_9(%arg0: i32) -> (i32, i32) {
    %c0_i32 = arith.constant 0 : i32
    %c0_i32_0 = arith.constant 0 : i32
    %c0_i32_1 = arith.constant 0 : i32
    return %c0_i32, %c0_i32_0 : i32, i32
  }
  func.func @transform_10(%arg0: i32) -> (i32, i32) {
    %c0_i32 = arith.constant 0 : i32
    %c0_i32_0 = arith.constant 0 : i32
    %c0_i32_1 = arith.constant 0 : i32
    return %c0_i32, %c0_i32_0 : i32, i32
  }
  func.func @transform_11(%arg0: i32) -> (i32, i32) {
    %c0_i32 = arith.constant 0 : i32
    %c0_i32_0 = arith.constant 0 : i32
    %c0_i32_1 = arith.constant 0 : i32
    return %c0_i32, %c0_i32_0 : i32, i32
  }
  func.func @transform_12(%arg0: i32) -> (i32, i32) {
    %c0_i32 = arith.constant 0 : i32
    %c0_i32_0 = arith.constant 0 : i32
    %c0_i32_1 = arith.constant 0 : i32
    return %c0_i32, %c0_i32_0 : i32, i32
  }
  func.func @transform_13(%arg0: i32) -> (i32, i32) {
    %c0_i32 = arith.constant 0 : i32
    %c0_i32_0 = arith.constant 0 : i32
    %c0_i32_1 = arith.constant 0 : i32
    return %c0_i32, %c0_i32_0 : i32, i32
  }
  func.func @transform_14(%arg0: i32) -> (i32, i32, i32) {
    %c0_i32 = arith.constant 0 : i32
    %c0_i32_0 = arith.constant 0 : i32
    %c0_i32_1 = arith.constant 0 : i32
    return %arg0, %c0_i32, %c0_i32_0 : i32, i32, i32
  }
  func.func @transform_15(%arg0: i32) -> (i32, i32) {
    %c0_i32 = arith.constant 0 : i32
    %c0_i32_0 = arith.constant 0 : i32
    %c0_i32_1 = arith.constant 0 : i32
    return %c0_i32, %c0_i32_0 : i32, i32
  }
  func.func @transform_16(%arg0: i32) -> (i32, i32) {
    %c0_i32 = arith.constant 0 : i32
    %c0_i32_0 = arith.constant 0 : i32
    %c0_i32_1 = arith.constant 0 : i32
    return %c0_i32, %c0_i32_0 : i32, i32
  }
}

</mosaic_0001>

<llo_original>
// kernel: decoder_decode.1
$region0: #{decoder_decode.1}
  #allocation0 [shape = 'u32[]', space=smem, size = 0x4, offset = 0x4, fixed_abs, tag = 'smem constant byte address 0x4 - core index']
  #allocation1 [shape = 'u32[144,128]{1,0:T(1,128)}', space=vmem, size = 0x12000, scoped, tag = 'internal scratch']
  #allocation2 [shape = 'f32[8,128]{1,0:T(8,128)}', space=vmem, size = 0x1000, scoped, tag = 'scratch operand']
  #allocation3 [shape = 'f32[8,128]{1,0:T(8,128)}', space=vmem, size = 0x1000, scoped, tag = 'scratch operand']
  #allocation4 [shape = 'f32[8,8,32]{2,1,0:T(8,128)}', space=vmem, size = 0x8000, scoped, tag = 'scratch operand']
  #allocation5 [shape = 'bf16[8,8,32]{2,1,0:T(8,128)(2,1)}', space=vmem, size = 0x4000, scoped, tag = 'scratch operand']
  %s0 = inlined_call_operand.vmem [shape: bf16[1,8,16], index: 0, kind: input, shape index: {}]
  %s1 = inlined_call_operand.vmem [shape: f32[8,8,64], index: 1, kind: input, shape index: {}]
  %s2 = inlined_call_operand.vmem [shape: f32[8,128], index: 2, kind: input, shape index: {}]
  %s3 = inlined_call_operand.vmem [shape: f32[8,128], index: 3, kind: input, shape index: {}]
  %s4 = inlined_call_operand.vmem [shape: bf16[128,32], index: 4, kind: input, shape index: {}]
  %s5 = inlined_call_operand.vmem [shape: f32[64,32], index: 5, kind: input, shape index: {}]
  %s6 = inlined_call_operand.hbm [shape: f32[1,1,32], index: 6, kind: input, shape index: {}]
  %s7 = inlined_call_operand.vmem [shape: f32[64,32], index: 7, kind: input, shape index: {}]
  %s8 = inlined_call_operand.vmem [shape: bf16[16,512], index: 8, kind: input, shape index: {}]
  %s9 = inlined_call_operand.vmem [shape: bf16[32,512], index: 9, kind: input, shape index: {}]
  %s10 = inlined_call_operand.vmem [shape: bf16[128,512], index: 10, kind: input, shape index: {}]
  %s11 = inlined_call_operand.hbm [shape: f32[1,512], index: 11, kind: input, shape index: {}]
  %s12 = inlined_call_operand.vmem [shape: bf16[128,128], index: 12, kind: input, shape index: {}]
  %s13 = inlined_call_operand.hbm [shape: f32[1,128], index: 13, kind: input, shape index: {}]
  %s14 = inlined_call_operand.vmem [shape: f32[1,8,128], index: 14, kind: output, shape index: {0}]
  %s15 = inlined_call_operand.vmem [shape: f32[8,128], index: 15, kind: output, shape index: {1}]
  %s16 = inlined_call_operand.vmem [shape: f32[8,128], index: 16, kind: output, shape index: {2}]
  %17 = xla_tuple %s14, %s15, %s16
  %s18 = sld [smem:[#allocation0]]
  $region102: #{decoder_decode.1} parent=0
    _
  %s20 = ssub.s32 1, %s18
  %s21 = scalar_select 0, %s20, %s18
  $region1: #{decoder_decode.1} parent=0
    #allocation6 [shape = 'u8[512]{0}', space=vmem, size = 0x400, scoped, tag = 'input window, operand 6, single buffered']
    #allocation7 [shape = 's32[1]{0}', space=sflag, size = 0x4, scoped, tag = 'scoped memory for decoder_decode.1']
    #allocation8 [shape = 'u8[2048]{0}', space=vmem, size = 0x800, scoped, tag = 'input window, operand 11, single buffered']
    #allocation9 [shape = 's32[1]{0}', space=sflag, size = 0x4, scoped, tag = 'scoped memory for decoder_decode.1']
    #allocation10 [shape = 'u8[512]{0}', space=vmem, size = 0x400, scoped, tag = 'input window, operand 13, single buffered']
    %22 = vsyncpa [#allocation7], 0
    %23 = vsyncpa [#allocation9], 0
    // Predicated region
    $region2: #{decoder_decode.1} parent=1 // pred_check
      _
    $region3: #{decoder_decode.1} parent=1 // pred_check_branch
      %25 = sbr.rel (0) target = $region5
    $region4: #{decoder_decode.1} parent=1 // pred_region
      _
    $region5: #{decoder_decode.1} parent=1 // pred_fallthru
      _
    // Predicated region
    $region6: #{decoder_decode.1} parent=1 // pred_check
      _
    $region7: #{decoder_decode.1} parent=1 // pred_check_branch
      %27 = sbr.rel (0) target = $region9
    $region8: #{decoder_decode.1} parent=1 // pred_region
      _
    $region9: #{decoder_decode.1} parent=1 // pred_fallthru
      _
    // Predicated region
    $region10: #{decoder_decode.1} parent=1 // pred_check
      _
    $region11: #{decoder_decode.1} parent=1 // pred_check_branch
      %29 = sbr.rel (0) target = $region13
    $region12: #{decoder_decode.1} parent=1 // pred_region
      _
    $region13: #{decoder_decode.1} parent=1 // pred_fallthru
      _
    // Predicated region
    $region14: #{decoder_decode.1} parent=1 // pred_check
      _
    $region15: #{decoder_decode.1} parent=1 // pred_check_branch
      %31 = sbr.rel (0) target = $region17
    $region16: #{decoder_decode.1} parent=1 // pred_region
      _
    $region17: #{decoder_decode.1} parent=1 // pred_fallthru
      _
    // Predicated region
    $region18: #{decoder_decode.1} parent=1 // pred_check
      _
    $region19: #{decoder_decode.1} parent=1 // pred_check_branch
      %33 = sbr.rel (0) target = $region21
    $region20: #{decoder_decode.1} parent=1 // pred_region
      _
    $region21: #{decoder_decode.1} parent=1 // pred_fallthru
      _
    // Predicated region
    $region22: #{decoder_decode.1} parent=1 // pred_check
      _
    $region23: #{decoder_decode.1} parent=1 // pred_check_branch
      %35 = sbr.rel (0) target = $region25
    $region24: #{decoder_decode.1} parent=1 // pred_region
      _
    $region25: #{decoder_decode.1} parent=1 // pred_fallthru
      _
    // Predicated region
    $region26: #{decoder_decode.1} parent=1 // pred_check
      _
    $region27: #{decoder_decode.1} parent=1 // pred_check_branch
      %37 = sbr.rel (0) target = $region29
    $region28: #{decoder_decode.1} parent=1 // pred_region
      %s39 = ssub.s32 16, 16
      %40 = vsyncadd [#allocation7], %s39
      %s42 = sshll.u32 [#allocation6], 4
      %s43 = int_to_ptr.vmem [resolvable:$true] %s42
      %45 = dma.hbm_to_vmem [thread:$0]  %s6, 16, %s43, [#allocation7]
    $region29: #{decoder_decode.1} parent=1 // pred_fallthru
      _
    // Predicated region
    $region30: #{decoder_decode.1} parent=1 // pred_check
      _
    $region31: #{decoder_decode.1} parent=1 // pred_check_branch
      %47 = sbr.rel (0) target = $region33
    $region32: #{decoder_decode.1} parent=1 // pred_region
      _
    $region33: #{decoder_decode.1} parent=1 // pred_fallthru
      _
    // Predicated region
    $region34: #{decoder_decode.1} parent=1 // pred_check
      _
    $region35: #{decoder_decode.1} parent=1 // pred_check_branch
      %49 = sbr.rel (0) target = $region37
    $region36: #{decoder_decode.1} parent=1 // pred_region
      _
    $region37: #{decoder_decode.1} parent=1 // pred_fallthru
      _
    // Predicated region
    $region38: #{decoder_decode.1} parent=1 // pred_check
      _
    $region39: #{decoder_decode.1} parent=1 // pred_check_branch
      %51 = sbr.rel (0) target = $region41
    $region40: #{decoder_decode.1} parent=1 // pred_region
      _
    $region41: #{decoder_decode.1} parent=1 // pred_fallthru
      _
    // Predicated region
    $region42: #{decoder_decode.1} parent=1 // pred_check
      _
    $region43: #{decoder_decode.1} parent=1 // pred_check_branch
      %53 = sbr.rel (0) target = $region45
    $region44: #{decoder_decode.1} parent=1 // pred_region
      _
    $region45: #{decoder_decode.1} parent=1 // pred_fallthru
      _
    // Predicated region
    $region46: #{decoder_decode.1} parent=1 // pred_check
      _
    $region47: #{decoder_decode.1} parent=1 // pred_check_branch
      %55 = sbr.rel (0) target = $region49
    $region48: #{decoder_decode.1} parent=1 // pred_region
      %s57 = ssub.s32 64, 64
      %58 = vsyncadd [#allocation9], %s57
      %s60 = sshll.u32 [#allocation8], 4
      %s61 = int_to_ptr.vmem [resolvable:$true] %s60
      %63 = dma.hbm_to_vmem [thread:$0]  %s11, 64, %s61, [#allocation9]
    $region49: #{decoder_decode.1} parent=1 // pred_fallthru
      _
    // Predicated region
    $region50: #{decoder_decode.1} parent=1 // pred_check
      _
    $region51: #{decoder_decode.1} parent=1 // pred_check_branch
      %65 = sbr.rel (0) target = $region53
    $region52: #{decoder_decode.1} parent=1 // pred_region
      _
    $region53: #{decoder_decode.1} parent=1 // pred_fallthru
      _
    // Predicated region
    $region54: #{decoder_decode.1} parent=1 // pred_check
      _
    $region55: #{decoder_decode.1} parent=1 // pred_check_branch
      %67 = sbr.rel (0) target = $region57
    $region56: #{decoder_decode.1} parent=1 // pred_region
      %s69 = ssub.s32 16, 16
      %70 = vsyncadd [#allocation9], %s69
      %s72 = sshll.u32 [#allocation10], 4
      %s73 = int_to_ptr.vmem [resolvable:$true] %s72
      %75 = dma.hbm_to_vmem [thread:$0]  %s13, 16, %s73, [#allocation9]
    $region57: #{decoder_decode.1} parent=1 // pred_fallthru
      _
    // Predicated region
    $region58: #{decoder_decode.1} parent=1 // pred_check
      _
    $region59: #{decoder_decode.1} parent=1 // pred_check_branch
      %77 = sbr.rel (0) target = $region61
    $region60: #{decoder_decode.1} parent=1 // pred_region
      %78 = dma.done [#allocation7], 16
    $region61: #{decoder_decode.1} parent=1 // pred_fallthru
      _
    // Predicated region
    $region62: #{decoder_decode.1} parent=1 // pred_check
      _
    $region63: #{decoder_decode.1} parent=1 // pred_check_branch
      %80 = sbr.rel (0) target = $region65
    $region64: #{decoder_decode.1} parent=1 // pred_region
      %81 = dma.done [#allocation9], 64
    $region65: #{decoder_decode.1} parent=1 // pred_fallthru
      _
    // Predicated region
    $region66: #{decoder_decode.1} parent=1 // pred_check
      _
    $region67: #{decoder_decode.1} parent=1 // pred_check_branch
      %83 = sbr.rel (0) target = $region69
    $region68: #{decoder_decode.1} parent=1 // pred_region
      %84 = dma.done [#allocation9], 16
    $region69: #{decoder_decode.1} parent=1 // pred_fallthru
      _
    %p86 = scmp.eq.s32.totalorder 0, 0
    // Predicated region
    $region70: #{decoder_decode.1} parent=1 // pred_check
      %p87 = pneg %p86
    $region71: #{decoder_decode.1} parent=1 // pred_check_branch
      %89 = sbr.rel (%p87) target = $region73
    $region72: #{decoder_decode.1} parent=1 // pred_region
      %v90 = vld [vmem:[%s2] sm:$0xff]
      %91 = vst [vmem:[#allocation2] sm:$0xff] %v90
      %v92 = vld [vmem:[%s3] sm:$0xff]
      %93 = vst [vmem:[#allocation3] sm:$0xff] %v92
      %v94 = vld [vmem:[%s1] sm:$0xff]
      %v95 = vld [vmem:[%s1 + $0x8] sm:$0xff]
      %v96 = vld [vmem:[%s1 + $0x10] sm:$0xff]
      %v97 = vld [vmem:[%s1 + $0x18] sm:$0xff]
      %v98 = vld [vmem:[%s1 + $0x20] sm:$0xff]
      %v99 = vld [vmem:[%s1 + $0x28] sm:$0xff]
      %v100 = vld [vmem:[%s1 + $0x30] sm:$0xff]
      %v101 = vld [vmem:[%s1 + $0x38] sm:$0xff]
      %v102 = vld [vmem:[%s5] sm:$0xff]
      %v103 = vld [vmem:[%s5 + $0x8] sm:$0xff]
      %v104 = vld [vmem:[%s5 + $0x10] sm:$0xff]
      %v105 = vld [vmem:[%s5 + $0x18] sm:$0xff]
      %v106 = vld [vmem:[%s5 + $0x20] sm:$0xff]
      %v107 = vld [vmem:[%s5 + $0x28] sm:$0xff]
      %v108 = vld [vmem:[%s5 + $0x30] sm:$0xff]
      %v109 = vld [vmem:[%s5 + $0x38] sm:$0xff]
      %vm110 = vcmask 523264
      %v112 = vsel %vm110, %v94, 0
      %v115 = vsel %vm110, %v95, 0
      %v118 = vsel %vm110, %v96, 0
      %v121 = vsel %vm110, %v97, 0
      %v124 = vsel %vm110, %v98, 0
      %v127 = vsel %vm110, %v99, 0
      %v130 = vsel %vm110, %v100, 0
      %v133 = vsel %vm110, %v101, 0
      %135 = vmatprep.subr.mxu0 0.0
      %136 = vmatpush1.msra.mxu0 %v102
      %137 = vmatprep.subr.mxu0 0.0
      %138 = vmatpush1.msra.mxu0 %v103
      %139 = vmatprep.subr.mxu0 0.0
      %140 = vmatpush1.msra.mxu0 %v104
      %141 = vmatprep.subr.mxu0 0.0
      %142 = vmatpush1.msra.mxu0 %v105
      %143 = vmatprep.subr.mxu0 0.0
      %144 = vmatpush1.msra.mxu0 %v106
      %145 = vmatprep.subr.mxu0 0.0
      %146 = vmatpush1.msra.mxu0 %v107
      %147 = vmatprep.subr.mxu0 0.0
      %148 = vmatpush1.msra.mxu0 %v108
      %149 = vmatprep.subr.mxu0 0.0
      %150 = vmatpush1.msra.mxu0 %v109
      %151 = vmatprep.subr.mxu0 0.0
      %152 = vmatpush1.msra.mxu0 0.0
      %153 = vmatprep.subr.mxu0 0.0
      %154 = vmatpush1.msra.mxu0 0.0
      %155 = vmatprep.subr.mxu0 0.0
      %156 = vmatpush1.msra.mxu0 0.0
      %157 = vmatprep.subr.mxu0 0.0
      %158 = vmatpush1.msra.mxu0 0.0
      %159 = vmatprep.subr.mxu0 0.0
      %160 = vmatpush1.msra.mxu0 0.0
      %161 = vmatprep.subr.mxu0 0.0
      %162 = vmatpush1.msra.mxu0 0.0
      %163 = vmatprep.subr.mxu0 0.0
      %164 = vmatpush1.msra.mxu0 0.0
      %165 = vmatprep.subr.mxu0 0.0
      %166 = vmatpush1.msra.mxu0 0.0
      %167 = vmatprep.subr.mxu0 0.0
      %168 = vmatpush1.msra.mxu0 0.0
      %169 = vmatprep.subr.mxu0 0.0
      %170 = vmatpush1.msra.mxu0 0.0
      %171 = vmatprep.subr.mxu0 0.0
      %172 = vmatpush1.msra.mxu0 0.0
      %173 = vmatprep.subr.mxu0 0.0
      %174 = vmatpush1.msra.mxu0 0.0
      %175 = vmatprep.subr.mxu0 0.0
      %176 = vmatpush1.msra.mxu0 0.0
      %177 = vmatprep.subr.mxu0 0.0
      %178 = vmatpush1.msra.mxu0 0.0
      %179 = vmatprep.subr.mxu0 0.0
      %180 = vmatpush1.msra.mxu0 0.0
      %181 = vmatprep.subr.mxu0 0.0
      %182 = vmatpush1.msra.mxu0 0.0
      %183 = vmatprep.subr.mxu0 0.0
      %184 = vmatpush1.msra.mxu0 0.0
      %185 = vmatprep.subr.mxu0 0.0
      %186 = vmatpush1.msra.mxu0 0.0
      %187 = vmatprep.subr.mxu0 0.0
      %188 = vmatpush1.msra.mxu0 0.0
      %189 = vmatprep.subr.mxu0 0.0
      %190 = vmatpush1.msra.mxu0 0.0
      %191 = vmatprep.subr.mxu0 0.0
      %192 = vmatpush1.msra.mxu0 0.0
      %193 = vmatprep.subr.mxu0 0.0
      %194 = vmatpush1.msra.mxu0 0.0
      %195 = vmatprep.subr.mxu0 0.0
      %196 = vmatpush1.msra.mxu0 0.0
      %197 = vmatprep.subr.mxu0 0.0
      %198 = vmatpush1.msra.mxu0 0.0
      %199 = vmatprep.mubr.f32.mxu0 0.0
      %200 = vmatmul.mubr.f32.gmra.mrb[0].mxu0 %v112
      %v201 = vpop.f32.mrb[0].mxu0
      %v202 = vadd.f32 0.0, %v201
      %v203 = vpop.f32.mrb[0].mxu0
      %204 = vmatprep.mubr.f32.mxu0 0.0
      %205 = vmatmul.mubr.f32.gmra.mrb[0].mxu0 %v115
      %v206 = vpop.f32.mrb[0].mxu0
      %v207 = vadd.f32 0.0, %v206
      %v208 = vpop.f32.mrb[0].mxu0
      %209 = vmatprep.mubr.f32.mxu0 0.0
      %210 = vmatmul.mubr.f32.gmra.mrb[0].mxu0 %v118
      %v211 = vpop.f32.mrb[0].mxu0
      %v212 = vadd.f32 0.0, %v211
      %v213 = vpop.f32.mrb[0].mxu0
      %214 = vmatprep.mubr.f32.mxu0 0.0
      %215 = vmatmul.mubr.f32.gmra.mrb[0].mxu0 %v121
      %v216 = vpop.f32.mrb[0].mxu0
      %v217 = vadd.f32 0.0, %v216
      %v218 = vpop.f32.mrb[0].mxu0
      %219 = vmatprep.mubr.f32.mxu0 0.0
      %220 = vmatmul.mubr.f32.gmra.mrb[0].mxu0 %v124
      %v221 = vpop.f32.mrb[0].mxu0
      %v222 = vadd.f32 0.0, %v221
      %v223 = vpop.f32.mrb[0].mxu0
      %224 = vmatprep.mubr.f32.mxu0 0.0
      %225 = vmatmul.mubr.f32.gmra.mrb[0].mxu0 %v127
      %v226 = vpop.f32.mrb[0].mxu0
      %v227 = vadd.f32 0.0, %v226
      %v228 = vpop.f32.mrb[0].mxu0
      %229 = vmatprep.mubr.f32.mxu0 0.0
      %230 = vmatmul.mubr.f32.gmra.mrb[0].mxu0 %v130
      %v231 = vpop.f32.mrb[0].mxu0
      %v232 = vadd.f32 0.0, %v231
      %v233 = vpop.f32.mrb[0].mxu0
      %234 = vmatprep.mubr.f32.mxu0 0.0
      %235 = vmatmul.mubr.f32.gmra.mrb[0].mxu0 %v133
      %v236 = vpop.f32.mrb[0].mxu0
      %v237 = vadd.f32 0.0, %v236
      %v238 = vpop.f32.mrb[0].mxu0
      %239 = vdwg.mxu0
      %vm240 = vcmask 261120
      %241 = vst.msk [vmem:[#allocation4] sm:$0xff] %vm240, %v202
      %242 = vst.msk [vmem:[#allocation4 + $0x8] sm:$0xff] %vm240, %v207
      %243 = vst.msk [vmem:[#allocation4 + $0x10] sm:$0xff] %vm240, %v212
      %244 = vst.msk [vmem:[#allocation4 + $0x18] sm:$0xff] %vm240, %v217
      %245 = vst.msk [vmem:[#allocation4 + $0x20] sm:$0xff] %vm240, %v222
      %246 = vst.msk [vmem:[#allocation4 + $0x28] sm:$0xff] %vm240, %v227
      %247 = vst.msk [vmem:[#allocation4 + $0x30] sm:$0xff] %vm240, %v232
      %248 = vst.msk [vmem:[#allocation4 + $0x38] sm:$0xff] %vm240, %v237
      %v249 = vld [vmem:[%s7] sm:$0xff]
      %v250 = vld [vmem:[%s7 + $0x8] sm:$0xff]
      %v251 = vld [vmem:[%s7 + $0x10] sm:$0xff]
      %v252 = vld [vmem:[%s7 + $0x18] sm:$0xff]
      %v253 = vld [vmem:[%s7 + $0x20] sm:$0xff]
      %v254 = vld [vmem:[%s7 + $0x28] sm:$0xff]
      %v255 = vld [vmem:[%s7 + $0x30] sm:$0xff]
      %v256 = vld [vmem:[%s7 + $0x38] sm:$0xff]
      %257 = vmatprep.subr.mxu0 0.0
      %258 = vmatpush1.msra.mxu0 %v249
      %259 = vmatprep.subr.mxu0 0.0
      %260 = vmatpush1.msra.mxu0 %v250
      %261 = vmatprep.subr.mxu0 0.0
      %262 = vmatpush1.msra.mxu0 %v251
      %263 = vmatprep.subr.mxu0 0.0
      %264 = vmatpush1.msra.mxu0 %v252
      %265 = vmatprep.subr.mxu0 0.0
      %266 = vmatpush1.msra.mxu0 %v253
      %267 = vmatprep.subr.mxu0 0.0
      %268 = vmatpush1.msra.mxu0 %v254
      %269 = vmatprep.subr.mxu0 0.0
      %270 = vmatpush1.msra.mxu0 %v255
      %271 = vmatprep.subr.mxu0 0.0
      %272 = vmatpush1.msra.mxu0 %v256
      %273 = vmatprep.subr.mxu0 0.0
      %274 = vmatpush1.msra.mxu0 0.0
      %275 = vmatprep.subr.mxu0 0.0
      %276 = vmatpush1.msra.mxu0 0.0
      %277 = vmatprep.subr.mxu0 0.0
      %278 = vmatpush1.msra.mxu0 0.0
      %279 = vmatprep.subr.mxu0 0.0
      %280 = vmatpush1.msra.mxu0 0.0
      %281 = vmatprep.subr.mxu0 0.0
      %282 = vmatpush1.msra.mxu0 0.0
      %283 = vmatprep.subr.mxu0 0.0
      %284 = vmatpush1.msra.mxu0 0.0
      %285 = vmatprep.subr.mxu0 0.0
      %286 = vmatpush1.msra.mxu0 0.0
      %287 = vmatprep.subr.mxu0 0.0
      %288 = vmatpush1.msra.mxu0 0.0
      %289 = vmatprep.subr.mxu0 0.0
      %290 = vmatpush1.msra.mxu0 0.0
      %291 = vmatprep.subr.mxu0 0.0
      %292 = vmatpush1.msra.mxu0 0.0
      %293 = vmatprep.subr.mxu0 0.0
      %294 = vmatpush1.msra.mxu0 0.0
      %295 = vmatprep.subr.mxu0 0.0
      %296 = vmatpush1.msra.mxu0 0.0
      %297 = vmatprep.subr.mxu0 0.0
      %298 = vmatpush1.msra.mxu0 0.0
      %299 = vmatprep.subr.mxu0 0.0
      %300 = vmatpush1.msra.mxu0 0.0
      %301 = vmatprep.subr.mxu0 0.0
      %302 = vmatpush1.msra.mxu0 0.0
      %303 = vmatprep.subr.mxu0 0.0
      %304 = vmatpush1.msra.mxu0 0.0
      %305 = vmatprep.subr.mxu0 0.0
      %306 = vmatpush1.msra.mxu0 0.0
      %307 = vmatprep.subr.mxu0 0.0
      %308 = vmatpush1.msra.mxu0 0.0
      %309 = vmatprep.subr.mxu0 0.0
      %310 = vmatpush1.msra.mxu0 0.0
      %311 = vmatprep.subr.mxu0 0.0
      %312 = vmatpush1.msra.mxu0 0.0
      %313 = vmatprep.subr.mxu0 0.0
      %314 = vmatpush1.msra.mxu0 0.0
      %315 = vmatprep.subr.mxu0 0.0
      %316 = vmatpush1.msra.mxu0 0.0
      %317 = vmatprep.subr.mxu0 0.0
      %318 = vmatpush1.msra.mxu0 0.0
      %319 = vmatprep.subr.mxu0 0.0
      %320 = vmatpush1.msra.mxu0 0.0
      %321 = vmatprep.mubr.f32.mxu0 0.0
      %322 = vmatmul.mubr.f32.gmra.mrb[0].mxu0 %v112
      %v323 = vpop.f32.mrb[0].mxu0
      %v324 = vadd.f32 0.0, %v323
      %v325 = vpop.f32.mrb[0].mxu0
      %326 = vmatprep.mubr.f32.mxu0 0.0
      %327 = vmatmul.mubr.f32.gmra.mrb[0].mxu0 %v115
      %v328 = vpop.f32.mrb[0].mxu0
      %v329 = vadd.f32 0.0, %v328
      %v330 = vpop.f32.mrb[0].mxu0
      %331 = vmatprep.mubr.f32.mxu0 0.0
      %332 = vmatmul.mubr.f32.gmra.mrb[0].mxu0 %v118
      %v333 = vpop.f32.mrb[0].mxu0
      %v334 = vadd.f32 0.0, %v333
      %v335 = vpop.f32.mrb[0].mxu0
      %336 = vmatprep.mubr.f32.mxu0 0.0
      %337 = vmatmul.mubr.f32.gmra.mrb[0].mxu0 %v121
      %v338 = vpop.f32.mrb[0].mxu0
      %v339 = vadd.f32 0.0, %v338
      %v340 = vpop.f32.mrb[0].mxu0
      %341 = vmatprep.mubr.f32.mxu0 0.0
      %342 = vmatmul.mubr.f32.gmra.mrb[0].mxu0 %v124
      %v343 = vpop.f32.mrb[0].mxu0
      %v344 = vadd.f32 0.0, %v343
      %v345 = vpop.f32.mrb[0].mxu0
      %346 = vmatprep.mubr.f32.mxu0 0.0
      %347 = vmatmul.mubr.f32.gmra.mrb[0].mxu0 %v127
      %v348 = vpop.f32.mrb[0].mxu0
      %v349 = vadd.f32 0.0, %v348
      %v350 = vpop.f32.mrb[0].mxu0
      %351 = vmatprep.mubr.f32.mxu0 0.0
      %352 = vmatmul.mubr.f32.gmra.mrb[0].mxu0 %v130
      %v353 = vpop.f32.mrb[0].mxu0
      %v354 = vadd.f32 0.0, %v353
      %v355 = vpop.f32.mrb[0].mxu0
      %356 = vmatprep.mubr.f32.mxu0 0.0
      %357 = vmatmul.mubr.f32.gmra.mrb[0].mxu0 %v133
      %v358 = vpop.f32.mrb[0].mxu0
      %v359 = vadd.f32 0.0, %v358
      %v360 = vpop.f32.mrb[0].mxu0
      %361 = vdwg.mxu0
      %v362 = vpack.c.bf16 %v324, %v324
      %v363 = vpack.c.bf16 %v329, %v329
      %v364 = vpack.c.bf16 %v334, %v334
      %v365 = vpack.c.bf16 %v339, %v339
      %v366 = vpack.c.bf16 %v344, %v344
      %v367 = vpack.c.bf16 %v349, %v349
      %v368 = vpack.c.bf16 %v354, %v354
      %v369 = vpack.c.bf16 %v359, %v359
      %vm370 = vcmask 257024
      %371 = vst.msk [vmem:[#allocation5] sm:$0xf] %vm370, %v362
      %372 = vst.msk [vmem:[#allocation5 + $0x4] sm:$0xf] %vm370, %v363
      %373 = vst.msk [vmem:[#allocation5 + $0x8] sm:$0xf] %vm370, %v364
      %374 = vst.msk [vmem:[#allocation5 + $0xc] sm:$0xf] %vm370, %v365
      %375 = vst.msk [vmem:[#allocation5 + $0x10] sm:$0xf] %vm370, %v366
      %376 = vst.msk [vmem:[#allocation5 + $0x14] sm:$0xf] %vm370, %v367
      %377 = vst.msk [vmem:[#allocation5 + $0x18] sm:$0xf] %vm370, %v368
      %378 = vst.msk [vmem:[#allocation5 + $0x1c] sm:$0xf] %vm370, %v369
    $region73: #{decoder_decode.1} parent=1 // pred_fallthru
      _
    %v379 = vld [vmem:[#allocation2] sm:$0xff]
    %v380 = vld [vmem:[#allocation3] sm:$0xff]
    %v381 = vpack.c.bf16 %v379, %v379
    %v382 = vld [vmem:[%s4] sm:$0xf]
    %v383 = vld [vmem:[%s4 + $0x4] sm:$0xf]
    %v384 = vld [vmem:[%s4 + $0x8] sm:$0xf]
    %v385 = vld [vmem:[%s4 + $0xc] sm:$0xf]
    %v386 = vld [vmem:[%s4 + $0x10] sm:$0xf]
    %v387 = vld [vmem:[%s4 + $0x14] sm:$0xf]
    %v388 = vld [vmem:[%s4 + $0x18] sm:$0xf]
    %v389 = vld [vmem:[%s4 + $0x1c] sm:$0xf]
    %v390 = vld [vmem:[%s4 + $0x20] sm:$0xf]
    %v391 = vld [vmem:[%s4 + $0x24] sm:$0xf]
    %v392 = vld [vmem:[%s4 + $0x28] sm:$0xf]
    %v393 = vld [vmem:[%s4 + $0x2c] sm:$0xf]
    %v394 = vld [vmem:[%s4 + $0x30] sm:$0xf]
    %v395 = vld [vmem:[%s4 + $0x34] sm:$0xf]
    %v396 = vld [vmem:[%s4 + $0x38] sm:$0xf]
    %v397 = vld [vmem:[%s4 + $0x3c] sm:$0xf]
    %v414 = vunpack.c.l.b16 %v382
    %v415 = vunpack.c.l.b16 %v383
    %v416 = vunpack.c.l.b16 %v384
    %v417 = vunpack.c.l.b16 %v385
    %v418 = vunpack.c.l.b16 %v386
    %v419 = vunpack.c.l.b16 %v387
    %v420 = vunpack.c.l.b16 %v388
    %v421 = vunpack.c.l.b16 %v389
    %v422 = vunpack.c.l.b16 %v390
    %v423 = vunpack.c.l.b16 %v391
    %v424 = vunpack.c.l.b16 %v392
    %v425 = vunpack.c.l.b16 %v393
    %v426 = vunpack.c.l.b16 %v394
    %v427 = vunpack.c.l.b16 %v395
    %v428 = vunpack.c.l.b16 %v396
    %v429 = vunpack.c.l.b16 %v397
    %v430 = vpack.c.b16 %v415, %v414
    %v431 = vpack.c.b16 %v417, %v416
    %v432 = vpack.c.b16 %v419, %v418
    %v433 = vpack.c.b16 %v421, %v420
    %v434 = vpack.c.b16 %v423, %v422
    %v435 = vpack.c.b16 %v425, %v424
    %v436 = vpack.c.b16 %v427, %v426
    %v437 = vpack.c.b16 %v429, %v428
    %446 = vmatprep.subr.bf16.mxu0 0
    %447 = vmatpush1.bf16.msra.mxu0 %v430
    %448 = vmatprep.subr.bf16.mxu0 0
    %449 = vmatpush1.bf16.msra.mxu0 %v431
    %450 = vmatprep.subr.bf16.mxu0 0
    %451 = vmatpush1.bf16.msra.mxu0 %v432
    %452 = vmatprep.subr.bf16.mxu0 0
    %453 = vmatpush1.bf16.msra.mxu0 %v433
    %454 = vmatprep.subr.bf16.mxu0 0
    %455 = vmatpush1.bf16.msra.mxu0 %v434
    %456 = vmatprep.subr.bf16.mxu0 0
    %457 = vmatpush1.bf16.msra.mxu0 %v435
    %458 = vmatprep.subr.bf16.mxu0 0
    %459 = vmatpush1.bf16.msra.mxu0 %v436
    %460 = vmatprep.subr.bf16.mxu0 0
    %461 = vmatpush1.bf16.msra.mxu0 %v437
    %462 = vmatprep.subr.bf16.mxu0 0
    %463 = vmatpush1.bf16.msra.mxu0 0
    %464 = vmatprep.subr.bf16.mxu0 0
    %465 = vmatpush1.bf16.msra.mxu0 0
    %466 = vmatprep.subr.bf16.mxu0 0
    %467 = vmatpush1.bf16.msra.mxu0 0
    %468 = vmatprep.subr.bf16.mxu0 0
    %469 = vmatpush1.bf16.msra.mxu0 0
    %470 = vmatprep.subr.bf16.mxu0 0
    %471 = vmatpush1.bf16.msra.mxu0 0
    %472 = vmatprep.subr.bf16.mxu0 0
    %473 = vmatpush1.bf16.msra.mxu0 0
    %474 = vmatprep.subr.bf16.mxu0 0
    %475 = vmatpush1.bf16.msra.mxu0 0
    %476 = vmatprep.subr.bf16.mxu0 0
    %477 = vmatpush1.bf16.msra.mxu0 0
    %478 = vmatprep.mubr.bf16.mxu0 0
    %479 = vmatmul.mubr.bf16.gmra.mrb[0].mxu0 %v381
    %v480 = vpop.f32.mrb[0].mxu0
    %v481 = vadd.f32 0.0, %v480
    %v482 = vpop.f32.mrb[0].mxu0
    %v483 = vpop.f32.mrb[0].mxu0
    %v484 = vpop.f32.mrb[0].mxu0
    %485 = vdwg.mxu0
    %v487 = vcombine.high %v481, %v481
    %v489 = vunpack.c.l.s4 1966171168
    %v490 = vunpack.c.0.s8 %v489
    %v491 = vlaneseq
    %v492 = vshrl.u32 %v491, 7
    %v493 = vsub.s32 %v490, %v492
    %v494 = vrot.slane %v481, %v493
    %v496 = vunpack.c.l.s4 1966171168
    %v497 = vunpack.c.0.s8 %v496
    %v498 = vlaneseq
    %v499 = vshrl.u32 %v498, 7
    %v500 = vsub.s32 %v497, %v499
    %v501 = vrot.slane %v487, %v500
    %v502 = vcombine.high %v494, %v494
    %v503 = vcombine.high %v501, %v501
    %v505 = vunpack.c.l.s4 1966171168
    %v506 = vunpack.c.0.s8 %v505
    %v507 = vlaneseq
    %v508 = vshrl.u32 %v507, 7
    %v509 = vsub.s32 %v506, %v508
    %v510 = vrot.slane %v494, %v509
    %v512 = vunpack.c.l.s4 1966171168
    %v513 = vunpack.c.0.s8 %v512
    %v514 = vlaneseq
    %v515 = vshrl.u32 %v514, 7
    %v516 = vsub.s32 %v513, %v515
    %v517 = vrot.slane %v501, %v516
    %v519 = vunpack.c.l.s4 1966171168
    %v520 = vunpack.c.0.s8 %v519
    %v521 = vlaneseq
    %v522 = vshrl.u32 %v521, 7
    %v523 = vsub.s32 %v520, %v522
    %v524 = vrot.slane %v502, %v523
    %v526 = vunpack.c.l.s4 1966171168
    %v527 = vunpack.c.0.s8 %v526
    %v528 = vlaneseq
    %v529 = vshrl.u32 %v528, 7
    %v530 = vsub.s32 %v527, %v529
    %v531 = vrot.slane %v503, %v530
    %v532 = vcombine.high %v510, %v510
    %v533 = vcombine.high %v517, %v517
    %v534 = vcombine.high %v524, %v524
    %v535 = vcombine.high %v531, %v531
    %v536 = vld [vmem:[#allocation4] sm:$0xff]
    %v537 = vld [vmem:[#allocation4 + $0x8] sm:$0xff]
    %v538 = vld [vmem:[#allocation4 + $0x10] sm:$0xff]
    %v539 = vld [vmem:[#allocation4 + $0x18] sm:$0xff]
    %v540 = vld [vmem:[#allocation4 + $0x20] sm:$0xff]
    %v541 = vld [vmem:[#allocation4 + $0x28] sm:$0xff]
    %v542 = vld [vmem:[#allocation4 + $0x30] sm:$0xff]
    %v543 = vld [vmem:[#allocation4 + $0x38] sm:$0xff]
    %v544 = vlaneseq
    %v545 = vshrl.u32 %v544, 7
    %v546 = vsub.s32 0, %v545
    %v547 = vrot.slane %v510, %v546
    %v548 = vlaneseq
    %v549 = vshrl.u32 %v548, 7
    %v550 = vsub.s32 0, %v549
    %v551 = vrot.slane %v524, %v550
    %v552 = vlaneseq
    %v553 = vshrl.u32 %v552, 7
    %v554 = vsub.s32 0, %v553
    %v555 = vrot.slane %v532, %v554
    %v556 = vlaneseq
    %v557 = vshrl.u32 %v556, 7
    %v558 = vsub.s32 0, %v557
    %v559 = vrot.slane %v534, %v558
    %v560 = vlaneseq
    %v561 = vshrl.u32 %v560, 7
    %v562 = vsub.s32 0, %v561
    %v563 = vrot.slane %v517, %v562
    %v564 = vlaneseq
    %v565 = vshrl.u32 %v564, 7
    %v566 = vsub.s32 0, %v565
    %v567 = vrot.slane %v531, %v566
    %v568 = vlaneseq
    %v569 = vshrl.u32 %v568, 7
    %v570 = vsub.s32 0, %v569
    %v571 = vrot.slane %v533, %v570
    %v572 = vlaneseq
    %v573 = vshrl.u32 %v572, 7
    %v574 = vsub.s32 0, %v573
    %v575 = vrot.slane %v535, %v574
    %v584 = vadd.f32 %v547, %v536
    %v585 = vadd.f32 %v551, %v537
    %v586 = vadd.f32 %v555, %v538
    %v587 = vadd.f32 %v559, %v539
    %v588 = vadd.f32 %v563, %v540
    %v589 = vadd.f32 %v567, %v541
    %v590 = vadd.f32 %v571, %v542
    %v591 = vadd.f32 %v575, %v543
    %v592 = vtanh.pop %v584
    %v593 = vtanh.pop %v585
    %v594 = vtanh.pop %v586
    %v595 = vtanh.pop %v587
    %v596 = vtanh.pop %v588
    %v597 = vtanh.pop %v589
    %v598 = vtanh.pop %v590
    %v599 = vtanh.pop %v591
    %v600 = vld [vmem:[#allocation6] sm:$0x1]
    %v602 = vlaneseq
    %v603 = vshrl.u32 %v602, 7
    %v604 = vsub.s32 0, %v603
    %v605 = vrot.slane %v600, %v604
    %v607 = vmul.f32 %v592, %v605
    %v608 = vmul.f32 %v593, %v605
    %v609 = vmul.f32 %v594, %v605
    %v610 = vmul.f32 %v595, %v605
    %v611 = vmul.f32 %v596, %v605
    %v612 = vmul.f32 %v597, %v605
    %v613 = vmul.f32 %v598, %v605
    %v614 = vmul.f32 %v599, %v605
    %vm615 = vcmask 261120
    %v616 = vsel %vm615, %v607, 0.0
    %617 = vadd.xlane.f32.xlu0 %v616
    %v618 = vpop.xlane.xlu0 %617
    %v619 = vsel %vm615, %v608, 0.0
    %620 = vadd.xlane.f32.xlu0 %v619
    %v621 = vpop.xlane.xlu0 %620
    %v622 = vsel %vm615, %v609, 0.0
    %623 = vadd.xlane.f32.xlu0 %v622
    %v624 = vpop.xlane.xlu0 %623
    %v625 = vsel %vm615, %v610, 0.0
    %626 = vadd.xlane.f32.xlu0 %v625
    %v627 = vpop.xlane.xlu0 %626
    %v628 = vsel %vm615, %v611, 0.0
    %629 = vadd.xlane.f32.xlu0 %v628
    %v630 = vpop.xlane.xlu0 %629
    %v631 = vsel %vm615, %v612, 0.0
    %632 = vadd.xlane.f32.xlu0 %v631
    %v633 = vpop.xlane.xlu0 %632
    %v634 = vsel %vm615, %v613, 0.0
    %635 = vadd.xlane.f32.xlu0 %v634
    %v636 = vpop.xlane.xlu0 %635
    %v637 = vsel %vm615, %v614, 0.0
    %638 = vadd.xlane.f32.xlu0 %v637
    %v639 = vpop.xlane.xlu0 %638
    %v648 = vlaneseq
    %v649 = vand.u32 %v648, 127
    %v650 = vlaneseq
    %v651 = vshrl.u32 %v650, 7
    %v652 = vsub.s32 %v649, %v651
    %v653 = vrot.slane %v618, %v652
    %v654 = vlaneseq
    %v655 = vshrl.u32 %v654, 7
    %v656 = vsub.s32 %v649, %v655
    %v657 = vrot.slane %v621, %v656
    %v658 = vlaneseq
    %v659 = vshrl.u32 %v658, 7
    %v660 = vsub.s32 %v649, %v659
    %v661 = vrot.slane %v624, %v660
    %v662 = vlaneseq
    %v663 = vshrl.u32 %v662, 7
    %v664 = vsub.s32 %v649, %v663
    %v665 = vrot.slane %v627, %v664
    %v666 = vlaneseq
    %v667 = vshrl.u32 %v666, 7
    %v668 = vsub.s32 %v649, %v667
    %v669 = vrot.slane %v630, %v668
    %v670 = vlaneseq
    %v671 = vshrl.u32 %v670, 7
    %v672 = vsub.s32 %v649, %v671
    %v673 = vrot.slane %v633, %v672
    %v674 = vlaneseq
    %v675 = vshrl.u32 %v674, 7
    %v676 = vsub.s32 %v649, %v675
    %v677 = vrot.slane %v636, %v676
    %v678 = vlaneseq
    %v679 = vshrl.u32 %v678, 7
    %v680 = vsub.s32 %v649, %v679
    %v681 = vrot.slane %v639, %v680
    %vm682 = vcmask 1041409
    %v683 = vsel %vm682, %v657, %v653
    %vm684 = vcmask 1042434
    %v685 = vsel %vm684, %v661, %v683
    %vm686 = vcmask 1043459
    %v687 = vsel %vm686, %v665, %v685
    %vm688 = vcmask 1044484
    %v689 = vsel %vm688, %v669, %v687
    %vm690 = vcmask 1045509
    %v691 = vsel %vm690, %v673, %v689
    %vm692 = vcmask 1046534
    %v693 = vsel %vm692, %v677, %v691
    %vm694 = vcmask 1047559
    %v695 = vsel %vm694, %v681, %v693
    %vm697 = vcmask 64512
    %v698 = vsel %vm697, %v695, -inf
    %699 = vmax.xlane.f32.xlu0 %v698
    %v700 = vpop.xlane.xlu0 %699
    %v702 = vlaneseq
    %v703 = vshrl.u32 %v702, 7
    %v704 = vsub.s32 0, %v703
    %v705 = vrot.slane %v700, %v704
    %v706 = vlaneseq
    %v707 = vshrl.u32 %v706, 7
    %v708 = vsub.s32 1, %v707
    %v709 = vrot.slane %v700, %v708
    %v710 = vlaneseq
    %v711 = vshrl.u32 %v710, 7
    %v712 = vsub.s32 2, %v711
    %v713 = vrot.slane %v700, %v712
    %v714 = vlaneseq
    %v715 = vshrl.u32 %v714, 7
    %v716 = vsub.s32 3, %v715
    %v717 = vrot.slane %v700, %v716
    %v718 = vlaneseq
    %v719 = vshrl.u32 %v718, 7
    %v720 = vsub.s32 4, %v719
    %v721 = vrot.slane %v700, %v720
    %v722 = vlaneseq
    %v723 = vshrl.u32 %v722, 7
    %v724 = vsub.s32 5, %v723
    %v725 = vrot.slane %v700, %v724
    %v726 = vlaneseq
    %v727 = vshrl.u32 %v726, 7
    %v728 = vsub.s32 6, %v727
    %v729 = vrot.slane %v700, %v728
    %v730 = vlaneseq
    %v731 = vshrl.u32 %v730, 7
    %v732 = vsub.s32 7, %v731
    %v733 = vrot.slane %v700, %v732
    %v742 = vsub.f32 %v618, %v705
    %v743 = vsub.f32 %v621, %v709
    %v744 = vsub.f32 %v624, %v713
    %v745 = vsub.f32 %v627, %v717
    %v746 = vsub.f32 %v630, %v721
    %v747 = vsub.f32 %v633, %v725
    %v748 = vsub.f32 %v636, %v729
    %v749 = vsub.f32 %v639, %v733
    %v750 = vmul.f32 %v742, 1.442695
    %v751 = vpow.pop %v750
    %v752 = vmul.f32 %v743, 1.442695
    %v753 = vpow.pop %v752
    %v754 = vmul.f32 %v744, 1.442695
    %v755 = vpow.pop %v754
    %v756 = vmul.f32 %v745, 1.442695
    %v757 = vpow.pop %v756
    %v758 = vmul.f32 %v746, 1.442695
    %v759 = vpow.pop %v758
    %v760 = vmul.f32 %v747, 1.442695
    %v761 = vpow.pop %v760
    %v762 = vmul.f32 %v748, 1.442695
    %v763 = vpow.pop %v762
    %v764 = vmul.f32 %v749, 1.442695
    %v765 = vpow.pop %v764
    %774 = vset.pattern.permute.xlu0 0
    %775 = vperm.xlu0 %774, %v751
    %v776 = vpop.permute.xlu0 %775
    %777 = vset.pattern.permute.xlu0 0
    %778 = vperm.xlu0 %777, %v753
    %v779 = vpop.permute.xlu0 %778
    %780 = vset.pattern.permute.xlu0 0
    %781 = vperm.xlu0 %780, %v755
    %v782 = vpop.permute.xlu0 %781
    %783 = vset.pattern.permute.xlu0 0
    %784 = vperm.xlu0 %783, %v757
    %v785 = vpop.permute.xlu0 %784
    %786 = vset.pattern.permute.xlu0 0
    %787 = vperm.xlu0 %786, %v759
    %v788 = vpop.permute.xlu0 %787
    %789 = vset.pattern.permute.xlu0 0
    %790 = vperm.xlu0 %789, %v761
    %v791 = vpop.permute.xlu0 %790
    %792 = vset.pattern.permute.xlu0 0
    %793 = vperm.xlu0 %792, %v763
    %v794 = vpop.permute.xlu0 %793
    %795 = vset.pattern.permute.xlu0 0
    %796 = vperm.xlu0 %795, %v765
    %v797 = vpop.permute.xlu0 %796
    %v798 = vlaneseq
    %v799 = vshrl.u32 %v798, 7
    %v800 = vsub.s32 %v649, %v799
    %v801 = vrot.slane %v776, %v800
    %v802 = vlaneseq
    %v803 = vshrl.u32 %v802, 7
    %v804 = vsub.s32 %v649, %v803
    %v805 = vrot.slane %v779, %v804
    %v806 = vlaneseq
    %v807 = vshrl.u32 %v806, 7
    %v808 = vsub.s32 %v649, %v807
    %v809 = vrot.slane %v782, %v808
    %v810 = vlaneseq
    %v811 = vshrl.u32 %v810, 7
    %v812 = vsub.s32 %v649, %v811
    %v813 = vrot.slane %v785, %v812
    %v814 = vlaneseq
    %v815 = vshrl.u32 %v814, 7
    %v816 = vsub.s32 %v649, %v815
    %v817 = vrot.slane %v788, %v816
    %v818 = vlaneseq
    %v819 = vshrl.u32 %v818, 7
    %v820 = vsub.s32 %v649, %v819
    %v821 = vrot.slane %v791, %v820
    %v822 = vlaneseq
    %v823 = vshrl.u32 %v822, 7
    %v824 = vsub.s32 %v649, %v823
    %v825 = vrot.slane %v794, %v824
    %v826 = vlaneseq
    %v827 = vshrl.u32 %v826, 7
    %v828 = vsub.s32 %v649, %v827
    %v829 = vrot.slane %v797, %v828
    %v830 = vsel %vm682, %v805, %v801
    %v831 = vsel %vm684, %v809, %v830
    %v832 = vsel %vm686, %v813, %v831
    %v833 = vsel %vm688, %v817, %v832
    %v834 = vsel %vm690, %v821, %v833
    %v835 = vsel %vm692, %v825, %v834
    %v836 = vsel %vm694, %v829, %v835
    %v838 = vsel %vm697, %v836, 0.0
    %839 = vadd.xlane.f32.xlu0 %v838
    %v840 = vpop.xlane.xlu0 %839
    %v841 = vrcp.pop %v840
    %v843 = vlaneseq
    %v844 = vshrl.u32 %v843, 7
    %v845 = vsub.s32 0, %v844
    %v846 = vrot.slane %v841, %v845
    %v847 = vlaneseq
    %v848 = vshrl.u32 %v847, 7
    %v849 = vsub.s32 1, %v848
    %v850 = vrot.slane %v841, %v849
    %v851 = vlaneseq
    %v852 = vshrl.u32 %v851, 7
    %v853 = vsub.s32 2, %v852
    %v854 = vrot.slane %v841, %v853
    %v855 = vlaneseq
    %v856 = vshrl.u32 %v855, 7
    %v857 = vsub.s32 3, %v856
    %v858 = vrot.slane %v841, %v857
    %v859 = vlaneseq
    %v860 = vshrl.u32 %v859, 7
    %v861 = vsub.s32 4, %v860
    %v862 = vrot.slane %v841, %v861
    %v863 = vlaneseq
    %v864 = vshrl.u32 %v863, 7
    %v865 = vsub.s32 5, %v864
    %v866 = vrot.slane %v841, %v865
    %v867 = vlaneseq
    %v868 = vshrl.u32 %v867, 7
    %v869 = vsub.s32 6, %v868
    %v870 = vrot.slane %v841, %v869
    %v871 = vlaneseq
    %v872 = vshrl.u32 %v871, 7
    %v873 = vsub.s32 7, %v872
    %v874 = vrot.slane %v841, %v873
    %v883 = vmul.f32 %v751, %v846
    %v884 = vmul.f32 %v753, %v850
    %v885 = vmul.f32 %v755, %v854
    %v886 = vmul.f32 %v757, %v858
    %v887 = vmul.f32 %v759, %v862
    %v888 = vmul.f32 %v761, %v866
    %v889 = vmul.f32 %v763, %v870
    %v890 = vmul.f32 %v765, %v874
    %v891 = vpack.c.bf16 %v883, %v883
    %v892 = vpack.c.bf16 %v884, %v884
    %v893 = vpack.c.bf16 %v885, %v885
    %v894 = vpack.c.bf16 %v886, %v886
    %v895 = vpack.c.bf16 %v887, %v887
    %v896 = vpack.c.bf16 %v888, %v888
    %v897 = vpack.c.bf16 %v889, %v889
    %v898 = vpack.c.bf16 %v890, %v890
    %v899 = vld [vmem:[#allocation5] sm:$0xf]
    %v900 = vld [vmem:[#allocation5 + $0x4] sm:$0xf]
    %v901 = vld [vmem:[#allocation5 + $0x8] sm:$0xf]
    %v902 = vld [vmem:[#allocation5 + $0xc] sm:$0xf]
    %v903 = vld [vmem:[#allocation5 + $0x10] sm:$0xf]
    %v904 = vld [vmem:[#allocation5 + $0x14] sm:$0xf]
    %v905 = vld [vmem:[#allocation5 + $0x18] sm:$0xf]
    %v906 = vld [vmem:[#allocation5 + $0x1c] sm:$0xf]
    %v908 = vunpack.c.l.b16 %v891
    %909 = vset.pattern.permute.xlu0 0
    %910 = vperm.xlu0 %909, %v908
    %v911 = vpop.permute.xlu0 %910
    %v912 = vlaneseq
    %v913 = vshrl.u32 %v912, 7
    %v914 = vsub.s32 %v649, %v913
    %v915 = vrot.slane %v911, %v914
    %v916 = vpack.c.b16 %v915, %v915
    %v918 = vsel %vm697, %v916, 0
    %vm920 = vcmask 1043456
    %v922 = vsel %vm920, %v899, 0
    %924 = vmatprep.subr.bf16.mxu0 0
    %925 = vmatpush1.bf16.msra.mxu0 %v922
    %926 = vmatprep.subr.bf16.mxu0 0
    %927 = vmatpush1.bf16.msra.mxu0 0
    %928 = vmatprep.subr.bf16.mxu0 0
    %929 = vmatpush1.bf16.msra.mxu0 0
    %930 = vmatprep.subr.bf16.mxu0 0
    %931 = vmatpush1.bf16.msra.mxu0 0
    %932 = vmatprep.subr.bf16.mxu0 0
    %933 = vmatpush1.bf16.msra.mxu0 0
    %934 = vmatprep.subr.bf16.mxu0 0
    %935 = vmatpush1.bf16.msra.mxu0 0
    %936 = vmatprep.subr.bf16.mxu0 0
    %937 = vmatpush1.bf16.msra.mxu0 0
    %938 = vmatprep.subr.bf16.mxu0 0
    %939 = vmatpush1.bf16.msra.mxu0 0
    %940 = vmatprep.subr.bf16.mxu0 0
    %941 = vmatpush1.bf16.msra.mxu0 0
    %942 = vmatprep.subr.bf16.mxu0 0
    %943 = vmatpush1.bf16.msra.mxu0 0
    %944 = vmatprep.subr.bf16.mxu0 0
    %945 = vmatpush1.bf16.msra.mxu0 0
    %946 = vmatprep.subr.bf16.mxu0 0
    %947 = vmatpush1.bf16.msra.mxu0 0
    %948 = vmatprep.subr.bf16.mxu0 0
    %949 = vmatpush1.bf16.msra.mxu0 0
    %950 = vmatprep.subr.bf16.mxu0 0
    %951 = vmatpush1.bf16.msra.mxu0 0
    %952 = vmatprep.subr.bf16.mxu0 0
    %953 = vmatpush1.bf16.msra.mxu0 0
    %954 = vmatprep.subr.bf16.mxu0 0
    %955 = vmatpush1.bf16.msra.mxu0 0
    %956 = vmatprep.mubr.bf16.mxu0 0
    %957 = vmatmul.mubr.bf16.gmra.mrb[0].mxu0 %v918
    %v958 = vpop.f32.mrb[0].mxu0
    %v959 = vadd.f32 0.0, %v958
    %v960 = vpop.f32.mrb[0].mxu0
    %v961 = vpop.f32.mrb[0].mxu0
    %v962 = vpop.f32.mrb[0].mxu0
    %963 = vdwg.mxu0
    %v965 = vunpack.c.l.b16 %v892
    %966 = vset.pattern.permute.xlu0 0
    %967 = vperm.xlu0 %966, %v965
    %v968 = vpop.permute.xlu0 %967
    %v969 = vlaneseq
    %v970 = vshrl.u32 %v969, 7
    %v971 = vsub.s32 %v649, %v970
    %v972 = vrot.slane %v968, %v971
    %v973 = vpack.c.b16 %v972, %v972
    %v975 = vsel %vm697, %v973, 0
    %v978 = vsel %vm920, %v900, 0
    %980 = vmatprep.subr.bf16.mxu0 0
    %981 = vmatpush1.bf16.msra.mxu0 %v978
    %982 = vmatprep.subr.bf16.mxu0 0
    %983 = vmatpush1.bf16.msra.mxu0 0
    %984 = vmatprep.subr.bf16.mxu0 0
    %985 = vmatpush1.bf16.msra.mxu0 0
    %986 = vmatprep.subr.bf16.mxu0 0
    %987 = vmatpush1.bf16.msra.mxu0 0
    %988 = vmatprep.subr.bf16.mxu0 0
    %989 = vmatpush1.bf16.msra.mxu0 0
    %990 = vmatprep.subr.bf16.mxu0 0
    %991 = vmatpush1.bf16.msra.mxu0 0
    %992 = vmatprep.subr.bf16.mxu0 0
    %993 = vmatpush1.bf16.msra.mxu0 0
    %994 = vmatprep.subr.bf16.mxu0 0
    %995 = vmatpush1.bf16.msra.mxu0 0
    %996 = vmatprep.subr.bf16.mxu0 0
    %997 = vmatpush1.bf16.msra.mxu0 0
    %998 = vmatprep.subr.bf16.mxu0 0
    %999 = vmatpush1.bf16.msra.mxu0 0
    %1000 = vmatprep.subr.bf16.mxu0 0
    %1001 = vmatpush1.bf16.msra.mxu0 0
    %1002 = vmatprep.subr.bf16.mxu0 0
    %1003 = vmatpush1.bf16.msra.mxu0 0
    %1004 = vmatprep.subr.bf16.mxu0 0
    %1005 = vmatpush1.bf16.msra.mxu0 0
    %1006 = vmatprep.subr.bf16.mxu0 0
    %1007 = vmatpush1.bf16.msra.mxu0 0
    %1008 = vmatprep.subr.bf16.mxu0 0
    %1009 = vmatpush1.bf16.msra.mxu0 0
    %1010 = vmatprep.subr.bf16.mxu0 0
    %1011 = vmatpush1.bf16.msra.mxu0 0
    %1012 = vmatprep.mubr.bf16.mxu0 0
    %1013 = vmatmul.mubr.bf16.gmra.mrb[0].mxu0 %v975
    %v1014 = vpop.f32.mrb[0].mxu0
    %v1015 = vadd.f32 0.0, %v1014
    %v1016 = vpop.f32.mrb[0].mxu0
    %v1017 = vpop.f32.mrb[0].mxu0
    %v1018 = vpop.f32.mrb[0].mxu0
    %1019 = vdwg.mxu0
    %v1021 = vunpack.c.l.b16 %v893
    %1022 = vset.pattern.permute.xlu0 0
    %1023 = vperm.xlu0 %1022, %v1021
    %v1024 = vpop.permute.xlu0 %1023
    %v1025 = vlaneseq
    %v1026 = vshrl.u32 %v1025, 7
    %v1027 = vsub.s32 %v649, %v1026
    %v1028 = vrot.slane %v1024, %v1027
    %v1029 = vpack.c.b16 %v1028, %v1028
    %v1031 = vsel %vm697, %v1029, 0
    %v1034 = vsel %vm920, %v901, 0
    %1036 = vmatprep.subr.bf16.mxu0 0
    %1037 = vmatpush1.bf16.msra.mxu0 %v1034
    %1038 = vmatprep.subr.bf16.mxu0 0
    %1039 = vmatpush1.bf16.msra.mxu0 0
    %1040 = vmatprep.subr.bf16.mxu0 0
    %1041 = vmatpush1.bf16.msra.mxu0 0
    %1042 = vmatprep.subr.bf16.mxu0 0
    %1043 = vmatpush1.bf16.msra.mxu0 0
    %1044 = vmatprep.subr.bf16.mxu0 0
    %1045 = vmatpush1.bf16.msra.mxu0 0
    %1046 = vmatprep.subr.bf16.mxu0 0
    %1047 = vmatpush1.bf16.msra.mxu0 0
    %1048 = vmatprep.subr.bf16.mxu0 0
    %1049 = vmatpush1.bf16.msra.mxu0 0
    %1050 = vmatprep.subr.bf16.mxu0 0
    %1051 = vmatpush1.bf16.msra.mxu0 0
    %1052 = vmatprep.subr.bf16.mxu0 0
    %1053 = vmatpush1.bf16.msra.mxu0 0
    %1054 = vmatprep.subr.bf16.mxu0 0
    %1055 = vmatpush1.bf16.msra.mxu0 0
    %1056 = vmatprep.subr.bf16.mxu0 0
    %1057 = vmatpush1.bf16.msra.mxu0 0
    %1058 = vmatprep.subr.bf16.mxu0 0
    %1059 = vmatpush1.bf16.msra.mxu0 0
    %1060 = vmatprep.subr.bf16.mxu0 0
    %1061 = vmatpush1.bf16.msra.mxu0 0
    %1062 = vmatprep.subr.bf16.mxu0 0
    %1063 = vmatpush1.bf16.msra.mxu0 0
    %1064 = vmatprep.subr.bf16.mxu0 0
    %1065 = vmatpush1.bf16.msra.mxu0 0
    %1066 = vmatprep.subr.bf16.mxu0 0
    %1067 = vmatpush1.bf16.msra.mxu0 0
    %1068 = vmatprep.mubr.bf16.mxu0 0
    %1069 = vmatmul.mubr.bf16.gmra.mrb[0].mxu0 %v1031
    %v1070 = vpop.f32.mrb[0].mxu0
    %v1071 = vadd.f32 0.0, %v1070
    %v1072 = vpop.f32.mrb[0].mxu0
    %v1073 = vpop.f32.mrb[0].mxu0
    %v1074 = vpop.f32.mrb[0].mxu0
    %1075 = vdwg.mxu0
    %v1077 = vunpack.c.l.b16 %v894
    %1078 = vset.pattern.permute.xlu0 0
    %1079 = vperm.xlu0 %1078, %v1077
    %v1080 = vpop.permute.xlu0 %1079
    %v1081 = vlaneseq
    %v1082 = vshrl.u32 %v1081, 7
    %v1083 = vsub.s32 %v649, %v1082
    %v1084 = vrot.slane %v1080, %v1083
    %v1085 = vpack.c.b16 %v1084, %v1084
    %v1087 = vsel %vm697, %v1085, 0
    %v1090 = vsel %vm920, %v902, 0
    %1092 = vmatprep.subr.bf16.mxu0 0
    %1093 = vmatpush1.bf16.msra.mxu0 %v1090
    %1094 = vmatprep.subr.bf16.mxu0 0
    %1095 = vmatpush1.bf16.msra.mxu0 0
    %1096 = vmatprep.subr.bf16.mxu0 0
    %1097 = vmatpush1.bf16.msra.mxu0 0
    %1098 = vmatprep.subr.bf16.mxu0 0
    %1099 = vmatpush1.bf16.msra.mxu0 0
    %1100 = vmatprep.subr.bf16.mxu0 0
    %1101 = vmatpush1.bf16.msra.mxu0 0
    %1102 = vmatprep.subr.bf16.mxu0 0
    %1103 = vmatpush1.bf16.msra.mxu0 0
    %1104 = vmatprep.subr.bf16.mxu0 0
    %1105 = vmatpush1.bf16.msra.mxu0 0
    %1106 = vmatprep.subr.bf16.mxu0 0
    %1107 = vmatpush1.bf16.msra.mxu0 0
    %1108 = vmatprep.subr.bf16.mxu0 0
    %1109 = vmatpush1.bf16.msra.mxu0 0
    %1110 = vmatprep.subr.bf16.mxu0 0
    %1111 = vmatpush1.bf16.msra.mxu0 0
    %1112 = vmatprep.subr.bf16.mxu0 0
    %1113 = vmatpush1.bf16.msra.mxu0 0
    %1114 = vmatprep.subr.bf16.mxu0 0
    %1115 = vmatpush1.bf16.msra.mxu0 0
    %1116 = vmatprep.subr.bf16.mxu0 0
    %1117 = vmatpush1.bf16.msra.mxu0 0
    %1118 = vmatprep.subr.bf16.mxu0 0
    %1119 = vmatpush1.bf16.msra.mxu0 0
    %1120 = vmatprep.subr.bf16.mxu0 0
    %1121 = vmatpush1.bf16.msra.mxu0 0
    %1122 = vmatprep.subr.bf16.mxu0 0
    %1123 = vmatpush1.bf16.msra.mxu0 0
    %1124 = vmatprep.mubr.bf16.mxu0 0
    %1125 = vmatmul.mubr.bf16.gmra.mrb[0].mxu0 %v1087
    %v1126 = vpop.f32.mrb[0].mxu0
    %v1127 = vadd.f32 0.0, %v1126
    %v1128 = vpop.f32.mrb[0].mxu0
    %v1129 = vpop.f32.mrb[0].mxu0
    %v1130 = vpop.f32.mrb[0].mxu0
    %1131 = vdwg.mxu0
    %v1133 = vunpack.c.l.b16 %v895
    %1134 = vset.pattern.permute.xlu0 0
    %1135 = vperm.xlu0 %1134, %v1133
    %v1136 = vpop.permute.xlu0 %1135
    %v1137 = vlaneseq
    %v1138 = vshrl.u32 %v1137, 7
    %v1139 = vsub.s32 %v649, %v1138
    %v1140 = vrot.slane %v1136, %v1139
    %v1141 = vpack.c.b16 %v1140, %v1140
    %v1143 = vsel %vm697, %v1141, 0
    %v1146 = vsel %vm920, %v903, 0
    %1148 = vmatprep.subr.bf16.mxu0 0
    %1149 = vmatpush1.bf16.msra.mxu0 %v1146
    %1150 = vmatprep.subr.bf16.mxu0 0
    %1151 = vmatpush1.bf16.msra.mxu0 0
    %1152 = vmatprep.subr.bf16.mxu0 0
    %1153 = vmatpush1.bf16.msra.mxu0 0
    %1154 = vmatprep.subr.bf16.mxu0 0
    %1155 = vmatpush1.bf16.msra.mxu0 0
    %1156 = vmatprep.subr.bf16.mxu0 0
    %1157 = vmatpush1.bf16.msra.mxu0 0
    %1158 = vmatprep.subr.bf16.mxu0 0
    %1159 = vmatpush1.bf16.msra.mxu0 0
    %1160 = vmatprep.subr.bf16.mxu0 0
    %1161 = vmatpush1.bf16.msra.mxu0 0
    %1162 = vmatprep.subr.bf16.mxu0 0
    %1163 = vmatpush1.bf16.msra.mxu0 0
    %1164 = vmatprep.subr.bf16.mxu0 0
    %1165 = vmatpush1.bf16.msra.mxu0 0
    %1166 = vmatprep.subr.bf16.mxu0 0
    %1167 = vmatpush1.bf16.msra.mxu0 0
    %1168 = vmatprep.subr.bf16.mxu0 0
    %1169 = vmatpush1.bf16.msra.mxu0 0
    %1170 = vmatprep.subr.bf16.mxu0 0
    %1171 = vmatpush1.bf16.msra.mxu0 0
    %1172 = vmatprep.subr.bf16.mxu0 0
    %1173 = vmatpush1.bf16.msra.mxu0 0
    %1174 = vmatprep.subr.bf16.mxu0 0
    %1175 = vmatpush1.bf16.msra.mxu0 0
    %1176 = vmatprep.subr.bf16.mxu0 0
    %1177 = vmatpush1.bf16.msra.mxu0 0
    %1178 = vmatprep.subr.bf16.mxu0 0
    %1179 = vmatpush1.bf16.msra.mxu0 0
    %1180 = vmatprep.mubr.bf16.mxu0 0
    %1181 = vmatmul.mubr.bf16.gmra.mrb[0].mxu0 %v1143
    %v1182 = vpop.f32.mrb[0].mxu0
    %v1183 = vadd.f32 0.0, %v1182
    %v1184 = vpop.f32.mrb[0].mxu0
    %v1185 = vpop.f32.mrb[0].mxu0
    %v1186 = vpop.f32.mrb[0].mxu0
    %1187 = vdwg.mxu0
    %v1189 = vunpack.c.l.b16 %v896
    %1190 = vset.pattern.permute.xlu0 0
    %1191 = vperm.xlu0 %1190, %v1189
    %v1192 = vpop.permute.xlu0 %1191
    %v1193 = vlaneseq
    %v1194 = vshrl.u32 %v1193, 7
    %v1195 = vsub.s32 %v649, %v1194
    %v1196 = vrot.slane %v1192, %v1195
    %v1197 = vpack.c.b16 %v1196, %v1196
    %v1199 = vsel %vm697, %v1197, 0
    %v1202 = vsel %vm920, %v904, 0
    %1204 = vmatprep.subr.bf16.mxu0 0
    %1205 = vmatpush1.bf16.msra.mxu0 %v1202
    %1206 = vmatprep.subr.bf16.mxu0 0
    %1207 = vmatpush1.bf16.msra.mxu0 0
    %1208 = vmatprep.subr.bf16.mxu0 0
    %1209 = vmatpush1.bf16.msra.mxu0 0
    %1210 = vmatprep.subr.bf16.mxu0 0
    %1211 = vmatpush1.bf16.msra.mxu0 0
    %1212 = vmatprep.subr.bf16.mxu0 0
    %1213 = vmatpush1.bf16.msra.mxu0 0
    %1214 = vmatprep.subr.bf16.mxu0 0
    %1215 = vmatpush1.bf16.msra.mxu0 0
    %1216 = vmatprep.subr.bf16.mxu0 0
    %1217 = vmatpush1.bf16.msra.mxu0 0
    %1218 = vmatprep.subr.bf16.mxu0 0
    %1219 = vmatpush1.bf16.msra.mxu0 0
    %1220 = vmatprep.subr.bf16.mxu0 0
    %1221 = vmatpush1.bf16.msra.mxu0 0
    %1222 = vmatprep.subr.bf16.mxu0 0
    %1223 = vmatpush1.bf16.msra.mxu0 0
    %1224 = vmatprep.subr.bf16.mxu0 0
    %1225 = vmatpush1.bf16.msra.mxu0 0
    %1226 = vmatprep.subr.bf16.mxu0 0
    %1227 = vmatpush1.bf16.msra.mxu0 0
    %1228 = vmatprep.subr.bf16.mxu0 0
    %1229 = vmatpush1.bf16.msra.mxu0 0
    %1230 = vmatprep.subr.bf16.mxu0 0
    %1231 = vmatpush1.bf16.msra.mxu0 0
    %1232 = vmatprep.subr.bf16.mxu0 0
    %1233 = vmatpush1.bf16.msra.mxu0 0
    %1234 = vmatprep.subr.bf16.mxu0 0
    %1235 = vmatpush1.bf16.msra.mxu0 0
    %1236 = vmatprep.mubr.bf16.mxu0 0
    %1237 = vmatmul.mubr.bf16.gmra.mrb[0].mxu0 %v1199
    %v1238 = vpop.f32.mrb[0].mxu0
    %v1239 = vadd.f32 0.0, %v1238
    %v1240 = vpop.f32.mrb[0].mxu0
    %v1241 = vpop.f32.mrb[0].mxu0
    %v1242 = vpop.f32.mrb[0].mxu0
    %1243 = vdwg.mxu0
    %v1245 = vunpack.c.l.b16 %v897
    %1246 = vset.pattern.permute.xlu0 0
    %1247 = vperm.xlu0 %1246, %v1245
    %v1248 = vpop.permute.xlu0 %1247
    %v1249 = vlaneseq
    %v1250 = vshrl.u32 %v1249, 7
    %v1251 = vsub.s32 %v649, %v1250
    %v1252 = vrot.slane %v1248, %v1251
    %v1253 = vpack.c.b16 %v1252, %v1252
    %v1255 = vsel %vm697, %v1253, 0
    %v1258 = vsel %vm920, %v905, 0
    %1260 = vmatprep.subr.bf16.mxu0 0
    %1261 = vmatpush1.bf16.msra.mxu0 %v1258
    %1262 = vmatprep.subr.bf16.mxu0 0
    %1263 = vmatpush1.bf16.msra.mxu0 0
    %1264 = vmatprep.subr.bf16.mxu0 0
    %1265 = vmatpush1.bf16.msra.mxu0 0
    %1266 = vmatprep.subr.bf16.mxu0 0
    %1267 = vmatpush1.bf16.msra.mxu0 0
    %1268 = vmatprep.subr.bf16.mxu0 0
    %1269 = vmatpush1.bf16.msra.mxu0 0
    %1270 = vmatprep.subr.bf16.mxu0 0
    %1271 = vmatpush1.bf16.msra.mxu0 0
    %1272 = vmatprep.subr.bf16.mxu0 0
    %1273 = vmatpush1.bf16.msra.mxu0 0
    %1274 = vmatprep.subr.bf16.mxu0 0
    %1275 = vmatpush1.bf16.msra.mxu0 0
    %1276 = vmatprep.subr.bf16.mxu0 0
    %1277 = vmatpush1.bf16.msra.mxu0 0
    %1278 = vmatprep.subr.bf16.mxu0 0
    %1279 = vmatpush1.bf16.msra.mxu0 0
    %1280 = vmatprep.subr.bf16.mxu0 0
    %1281 = vmatpush1.bf16.msra.mxu0 0
    %1282 = vmatprep.subr.bf16.mxu0 0
    %1283 = vmatpush1.bf16.msra.mxu0 0
    %1284 = vmatprep.subr.bf16.mxu0 0
    %1285 = vmatpush1.bf16.msra.mxu0 0
    %1286 = vmatprep.subr.bf16.mxu0 0
    %1287 = vmatpush1.bf16.msra.mxu0 0
    %1288 = vmatprep.subr.bf16.mxu0 0
    %1289 = vmatpush1.bf16.msra.mxu0 0
    %1290 = vmatprep.subr.bf16.mxu0 0
    %1291 = vmatpush1.bf16.msra.mxu0 0
    %1292 = vmatprep.mubr.bf16.mxu0 0
    %1293 = vmatmul.mubr.bf16.gmra.mrb[0].mxu0 %v1255
    %v1294 = vpop.f32.mrb[0].mxu0
    %v1295 = vadd.f32 0.0, %v1294
    %v1296 = vpop.f32.mrb[0].mxu0
    %v1297 = vpop.f32.mrb[0].mxu0
    %v1298 = vpop.f32.mrb[0].mxu0
    %1299 = vdwg.mxu0
    %v1301 = vunpack.c.l.b16 %v898
    %1302 = vset.pattern.permute.xlu0 0
    %1303 = vperm.xlu0 %1302, %v1301
    %v1304 = vpop.permute.xlu0 %1303
    %v1305 = vlaneseq
    %v1306 = vshrl.u32 %v1305, 7
    %v1307 = vsub.s32 %v649, %v1306
    %v1308 = vrot.slane %v1304, %v1307
    %v1309 = vpack.c.b16 %v1308, %v1308
    %v1311 = vsel %vm697, %v1309, 0
    %v1314 = vsel %vm920, %v906, 0
    %1316 = vmatprep.subr.bf16.mxu0 0
    %1317 = vmatpush1.bf16.msra.mxu0 %v1314
    %1318 = vmatprep.subr.bf16.mxu0 0
    %1319 = vmatpush1.bf16.msra.mxu0 0
    %1320 = vmatprep.subr.bf16.mxu0 0
    %1321 = vmatpush1.bf16.msra.mxu0 0
    %1322 = vmatprep.subr.bf16.mxu0 0
    %1323 = vmatpush1.bf16.msra.mxu0 0
    %1324 = vmatprep.subr.bf16.mxu0 0
    %1325 = vmatpush1.bf16.msra.mxu0 0
    %1326 = vmatprep.subr.bf16.mxu0 0
    %1327 = vmatpush1.bf16.msra.mxu0 0
    %1328 = vmatprep.subr.bf16.mxu0 0
    %1329 = vmatpush1.bf16.msra.mxu0 0
    %1330 = vmatprep.subr.bf16.mxu0 0
    %1331 = vmatpush1.bf16.msra.mxu0 0
    %1332 = vmatprep.subr.bf16.mxu0 0
    %1333 = vmatpush1.bf16.msra.mxu0 0
    %1334 = vmatprep.subr.bf16.mxu0 0
    %1335 = vmatpush1.bf16.msra.mxu0 0
    %1336 = vmatprep.subr.bf16.mxu0 0
    %1337 = vmatpush1.bf16.msra.mxu0 0
    %1338 = vmatprep.subr.bf16.mxu0 0
    %1339 = vmatpush1.bf16.msra.mxu0 0
    %1340 = vmatprep.subr.bf16.mxu0 0
    %1341 = vmatpush1.bf16.msra.mxu0 0
    %1342 = vmatprep.subr.bf16.mxu0 0
    %1343 = vmatpush1.bf16.msra.mxu0 0
    %1344 = vmatprep.subr.bf16.mxu0 0
    %1345 = vmatpush1.bf16.msra.mxu0 0
    %1346 = vmatprep.subr.bf16.mxu0 0
    %1347 = vmatpush1.bf16.msra.mxu0 0
    %1348 = vmatprep.mubr.bf16.mxu0 0
    %1349 = vmatmul.mubr.bf16.gmra.mrb[0].mxu0 %v1311
    %v1350 = vpop.f32.mrb[0].mxu0
    %v1351 = vadd.f32 0.0, %v1350
    %v1352 = vpop.f32.mrb[0].mxu0
    %v1353 = vpop.f32.mrb[0].mxu0
    %v1354 = vpop.f32.mrb[0].mxu0
    %1355 = vdwg.mxu0
    %v1356 = vtanh.pop %v959
    %v1357 = vtanh.pop %v1015
    %v1358 = vtanh.pop %v1071
    %v1359 = vtanh.pop %v1127
    %v1360 = vtanh.pop %v1183
    %v1361 = vtanh.pop %v1239
    %v1362 = vtanh.pop %v1295
    %v1363 = vtanh.pop %v1351
    %v1364 = vld [vmem:[%s0] sm:$0xf]
    %v1365 = vld [vmem:[%s8] sm:$0xff]
    %v1366 = vld [vmem:[%s8 + $0x8] sm:$0xff]
    %v1367 = vld [vmem:[%s8 + $0x10] sm:$0xff]
    %v1368 = vld [vmem:[%s8 + $0x18] sm:$0xff]
    %v1369 = vpack.c.bf16 %v1356, %v1356
    %v1370 = vpack.c.bf16 %v1357, %v1357
    %v1371 = vpack.c.bf16 %v1358, %v1358
    %v1372 = vpack.c.bf16 %v1359, %v1359
    %v1373 = vpack.c.bf16 %v1360, %v1360
    %v1374 = vpack.c.bf16 %v1361, %v1361
    %v1375 = vpack.c.bf16 %v1362, %v1362
    %v1376 = vpack.c.bf16 %v1363, %v1363
    %v1377 = vld [vmem:[%s9] sm:$0xff]
    %v1378 = vld [vmem:[%s9 + $0x8] sm:$0xff]
    %v1379 = vld [vmem:[%s9 + $0x10] sm:$0xff]
    %v1380 = vld [vmem:[%s9 + $0x18] sm:$0xff]
    %v1381 = vld [vmem:[%s9 + $0x20] sm:$0xff]
    %v1382 = vld [vmem:[%s9 + $0x28] sm:$0xff]
    %v1383 = vld [vmem:[%s9 + $0x30] sm:$0xff]
    %v1384 = vld [vmem:[%s9 + $0x38] sm:$0xff]
    %v1393 = vunpack.c.l.b16 %v1369
    %v1394 = vunpack.c.l.b16 %v1370
    %v1395 = vunpack.c.l.b16 %v1371
    %v1396 = vunpack.c.l.b16 %v1372
    %v1397 = vunpack.c.l.b16 %v1373
    %v1398 = vunpack.c.l.b16 %v1374
    %v1399 = vunpack.c.l.b16 %v1375
    %v1400 = vunpack.c.l.b16 %v1376
    %v1401 = vrot.slane %v1394, 7
    %v1402 = vsel %vm682, %v1401, %v1393
    %v1403 = vrot.slane %v1395, 6
    %v1404 = vsel %vm684, %v1403, %v1402
    %v1405 = vrot.slane %v1396, 5
    %v1406 = vsel %vm686, %v1405, %v1404
    %v1407 = vrot.slane %v1397, 4
    %v1408 = vsel %vm688, %v1407, %v1406
    %v1409 = vrot.slane %v1398, 3
    %v1410 = vsel %vm690, %v1409, %v1408
    %v1411 = vrot.slane %v1399, 2
    %v1412 = vsel %vm692, %v1411, %v1410
    %v1413 = vrot.slane %v1400, 1
    %v1414 = vsel %vm694, %v1413, %v1412
    %v1415 = vpack.c.b16 %v1414, %v1414
    %v1424 = vunpack.c.l.b16 %v1377
    %v1425 = vunpack.c.h.b16 %v1377
    %v1426 = vunpack.c.l.b16 %v1378
    %v1427 = vunpack.c.h.b16 %v1378
    %v1428 = vunpack.c.l.b16 %v1379
    %v1429 = vunpack.c.h.b16 %v1379
    %v1430 = vunpack.c.l.b16 %v1380
    %v1431 = vunpack.c.h.b16 %v1380
    %v1432 = vunpack.c.l.b16 %v1381
    %v1433 = vunpack.c.h.b16 %v1381
    %v1434 = vunpack.c.l.b16 %v1382
    %v1435 = vunpack.c.h.b16 %v1382
    %v1436 = vunpack.c.l.b16 %v1383
    %v1437 = vunpack.c.h.b16 %v1383
    %v1438 = vunpack.c.l.b16 %v1384
    %v1439 = vunpack.c.h.b16 %v1384
    %v1440 = vpack.c.b16 %v1428, %v1424
    %v1441 = vpack.c.b16 %v1429, %v1425
    %v1442 = vpack.c.b16 %v1430, %v1426
    %v1443 = vpack.c.b16 %v1431, %v1427
    %v1444 = vpack.c.b16 %v1436, %v1432
    %v1445 = vpack.c.b16 %v1437, %v1433
    %v1446 = vpack.c.b16 %v1438, %v1434
    %v1447 = vpack.c.b16 %v1439, %v1435
    %v1457 = vsel %vm615, %v1415, 0
    %1459 = vmatprep.subr.bf16.mxu0 %v1441
    %1460 = vmatpush1.bf16.msra.mxu0 %v1440
    %1461 = vmatprep.subr.bf16.mxu0 %v1445
    %1462 = vmatpush1.bf16.msra.mxu0 %v1444
    %1463 = vmatprep.subr.bf16.mxu0 0
    %1464 = vmatpush1.bf16.msra.mxu0 0
    %1465 = vmatprep.subr.bf16.mxu0 0
    %1466 = vmatpush1.bf16.msra.mxu0 0
    %1467 = vmatprep.subr.bf16.mxu0 0
    %1468 = vmatpush1.bf16.msra.mxu0 0
    %1469 = vmatprep.subr.bf16.mxu0 0
    %1470 = vmatpush1.bf16.msra.mxu0 0
    %1471 = vmatprep.subr.bf16.mxu0 0
    %1472 = vmatpush1.bf16.msra.mxu0 0
    %1473 = vmatprep.subr.bf16.mxu0 0
    %1474 = vmatpush1.bf16.msra.mxu0 0
    %1475 = vmatprep.subr.bf16.mxu0 0
    %1476 = vmatpush1.bf16.msra.mxu0 0
    %1477 = vmatprep.subr.bf16.mxu0 0
    %1478 = vmatpush1.bf16.msra.mxu0 0
    %1479 = vmatprep.subr.bf16.mxu0 0
    %1480 = vmatpush1.bf16.msra.mxu0 0
    %1481 = vmatprep.subr.bf16.mxu0 0
    %1482 = vmatpush1.bf16.msra.mxu0 0
    %1483 = vmatprep.subr.bf16.mxu0 0
    %1484 = vmatpush1.bf16.msra.mxu0 0
    %1485 = vmatprep.subr.bf16.mxu0 0
    %1486 = vmatpush1.bf16.msra.mxu0 0
    %1487 = vmatprep.subr.bf16.mxu0 0
    %1488 = vmatpush1.bf16.msra.mxu0 0
    %1489 = vmatprep.subr.bf16.mxu0 0
    %1490 = vmatpush1.bf16.msra.mxu0 0
    %1491 = vmatprep.mubr.bf16.mxu0 0
    %1492 = vmatmul.mubr.bf16.gmra.mrb[0].mxu0 %v1457
    %v1493 = vpop.f32.mrb[0].mxu0
    %v1494 = vadd.f32 0.0, %v1493
    %v1495 = vpop.f32.mrb[0].mxu0
    %v1496 = vadd.f32 0.0, %v1495
    %v1497 = vpop.f32.mrb[0].mxu0
    %v1498 = vpop.f32.mrb[0].mxu0
    %1499 = vdwg.mxu0
    %1500 = vmatprep.subr.bf16.mxu0 %v1443
    %1501 = vmatpush1.bf16.msra.mxu0 %v1442
    %1502 = vmatprep.subr.bf16.mxu0 %v1447
    %1503 = vmatpush1.bf16.msra.mxu0 %v1446
    %1504 = vmatprep.subr.bf16.mxu0 0
    %1505 = vmatpush1.bf16.msra.mxu0 0
    %1506 = vmatprep.subr.bf16.mxu0 0
    %1507 = vmatpush1.bf16.msra.mxu0 0
    %1508 = vmatprep.subr.bf16.mxu0 0
    %1509 = vmatpush1.bf16.msra.mxu0 0
    %1510 = vmatprep.subr.bf16.mxu0 0
    %1511 = vmatpush1.bf16.msra.mxu0 0
    %1512 = vmatprep.subr.bf16.mxu0 0
    %1513 = vmatpush1.bf16.msra.mxu0 0
    %1514 = vmatprep.subr.bf16.mxu0 0
    %1515 = vmatpush1.bf16.msra.mxu0 0
    %1516 = vmatprep.subr.bf16.mxu0 0
    %1517 = vmatpush1.bf16.msra.mxu0 0
    %1518 = vmatprep.subr.bf16.mxu0 0
    %1519 = vmatpush1.bf16.msra.mxu0 0
    %1520 = vmatprep.subr.bf16.mxu0 0
    %1521 = vmatpush1.bf16.msra.mxu0 0
    %1522 = vmatprep.subr.bf16.mxu0 0
    %1523 = vmatpush1.bf16.msra.mxu0 0
    %1524 = vmatprep.subr.bf16.mxu0 0
    %1525 = vmatpush1.bf16.msra.mxu0 0
    %1526 = vmatprep.subr.bf16.mxu0 0
    %1527 = vmatpush1.bf16.msra.mxu0 0
    %1528 = vmatprep.subr.bf16.mxu0 0
    %1529 = vmatpush1.bf16.msra.mxu0 0
    %1530 = vmatprep.subr.bf16.mxu0 0
    %1531 = vmatpush1.bf16.msra.mxu0 0
    %1532 = vmatprep.mubr.bf16.mxu0 0
    %1533 = vmatmul.mubr.bf16.gmra.mrb[0].mxu0 %v1457
    %v1534 = vpop.f32.mrb[0].mxu0
    %v1535 = vadd.f32 0.0, %v1534
    %v1536 = vpop.f32.mrb[0].mxu0
    %v1537 = vadd.f32 0.0, %v1536
    %v1538 = vpop.f32.mrb[0].mxu0
    %v1539 = vpop.f32.mrb[0].mxu0
    %1540 = vdwg.mxu0
    %v1545 = vunpack.c.l.b16 %v1365
    %v1546 = vunpack.c.h.b16 %v1365
    %v1547 = vunpack.c.l.b16 %v1366
    %v1548 = vunpack.c.h.b16 %v1366
    %v1549 = vunpack.c.l.b16 %v1367
    %v1550 = vunpack.c.h.b16 %v1367
    %v1551 = vunpack.c.l.b16 %v1368
    %v1552 = vunpack.c.h.b16 %v1368
    %v1553 = vpack.c.b16 %v1549, %v1545
    %v1554 = vpack.c.b16 %v1550, %v1546
    %v1555 = vpack.c.b16 %v1551, %v1547
    %v1556 = vpack.c.b16 %v1552, %v1548
    %vm1561 = vcmask 130048
    %v1563 = vsel %vm1561, %v1364, 0
    %1565 = vmatprep.subr.bf16.mxu0 %v1554
    %1566 = vmatpush1.bf16.msra.mxu0 %v1553
    %1567 = vmatprep.subr.bf16.mxu0 0
    %1568 = vmatpush1.bf16.msra.mxu0 0
    %1569 = vmatprep.subr.bf16.mxu0 0
    %1570 = vmatpush1.bf16.msra.mxu0 0
    %1571 = vmatprep.subr.bf16.mxu0 0
    %1572 = vmatpush1.bf16.msra.mxu0 0
    %1573 = vmatprep.subr.bf16.mxu0 0
    %1574 = vmatpush1.bf16.msra.mxu0 0
    %1575 = vmatprep.subr.bf16.mxu0 0
    %1576 = vmatpush1.bf16.msra.mxu0 0
    %1577 = vmatprep.subr.bf16.mxu0 0
    %1578 = vmatpush1.bf16.msra.mxu0 0
    %1579 = vmatprep.subr.bf16.mxu0 0
    %1580 = vmatpush1.bf16.msra.mxu0 0
    %1581 = vmatprep.subr.bf16.mxu0 0
    %1582 = vmatpush1.bf16.msra.mxu0 0
    %1583 = vmatprep.subr.bf16.mxu0 0
    %1584 = vmatpush1.bf16.msra.mxu0 0
    %1585 = vmatprep.subr.bf16.mxu0 0
    %1586 = vmatpush1.bf16.msra.mxu0 0
    %1587 = vmatprep.subr.bf16.mxu0 0
    %1588 = vmatpush1.bf16.msra.mxu0 0
    %1589 = vmatprep.subr.bf16.mxu0 0
    %1590 = vmatpush1.bf16.msra.mxu0 0
    %1591 = vmatprep.subr.bf16.mxu0 0
    %1592 = vmatpush1.bf16.msra.mxu0 0
    %1593 = vmatprep.subr.bf16.mxu0 0
    %1594 = vmatpush1.bf16.msra.mxu0 0
    %1595 = vmatprep.subr.bf16.mxu0 0
    %1596 = vmatpush1.bf16.msra.mxu0 0
    %1597 = vmatprep.mubr.bf16.mxu0 0
    %1598 = vmatmul.mubr.bf16.gmra.mrb[0].mxu0 %v1563
    %v1599 = vpop.f32.mrb[0].mxu0
    %v1600 = vadd.f32 %v1494, %v1599
    %v1601 = vpop.f32.mrb[0].mxu0
    %v1602 = vadd.f32 %v1496, %v1601
    %v1603 = vpop.f32.mrb[0].mxu0
    %v1604 = vpop.f32.mrb[0].mxu0
    %1605 = vdwg.mxu0
    %1606 = vmatprep.subr.bf16.mxu0 %v1556
    %1607 = vmatpush1.bf16.msra.mxu0 %v1555
    %1608 = vmatprep.subr.bf16.mxu0 0
    %1609 = vmatpush1.bf16.msra.mxu0 0
    %1610 = vmatprep.subr.bf16.mxu0 0
    %1611 = vmatpush1.bf16.msra.mxu0 0
    %1612 = vmatprep.subr.bf16.mxu0 0
    %1613 = vmatpush1.bf16.msra.mxu0 0
    %1614 = vmatprep.subr.bf16.mxu0 0
    %1615 = vmatpush1.bf16.msra.mxu0 0
    %1616 = vmatprep.subr.bf16.mxu0 0
    %1617 = vmatpush1.bf16.msra.mxu0 0
    %1618 = vmatprep.subr.bf16.mxu0 0
    %1619 = vmatpush1.bf16.msra.mxu0 0
    %1620 = vmatprep.subr.bf16.mxu0 0
    %1621 = vmatpush1.bf16.msra.mxu0 0
    %1622 = vmatprep.subr.bf16.mxu0 0
    %1623 = vmatpush1.bf16.msra.mxu0 0
    %1624 = vmatprep.subr.bf16.mxu0 0
    %1625 = vmatpush1.bf16.msra.mxu0 0
    %1626 = vmatprep.subr.bf16.mxu0 0
    %1627 = vmatpush1.bf16.msra.mxu0 0
    %1628 = vmatprep.subr.bf16.mxu0 0
    %1629 = vmatpush1.bf16.msra.mxu0 0
    %1630 = vmatprep.subr.bf16.mxu0 0
    %1631 = vmatpush1.bf16.msra.mxu0 0
    %1632 = vmatprep.subr.bf16.mxu0 0
    %1633 = vmatpush1.bf16.msra.mxu0 0
    %1634 = vmatprep.subr.bf16.mxu0 0
    %1635 = vmatpush1.bf16.msra.mxu0 0
    %1636 = vmatprep.subr.bf16.mxu0 0
    %1637 = vmatpush1.bf16.msra.mxu0 0
    %1638 = vmatprep.mubr.bf16.mxu0 0
    %1639 = vmatmul.mubr.bf16.gmra.mrb[0].mxu0 %v1563
    %v1640 = vpop.f32.mrb[0].mxu0
    %v1641 = vadd.f32 %v1535, %v1640
    %v1642 = vpop.f32.mrb[0].mxu0
    %v1643 = vadd.f32 %v1537, %v1642
    %v1644 = vpop.f32.mrb[0].mxu0
    %v1645 = vpop.f32.mrb[0].mxu0
    %1646 = vdwg.mxu0
    %v1647 = vld [vmem:[%s10] sm:$0xff]
    %v1648 = vld [vmem:[%s10 + $0x8] sm:$0xff]
    %v1649 = vld [vmem:[%s10 + $0x10] sm:$0xff]
    %v1650 = vld [vmem:[%s10 + $0x18] sm:$0xff]
    %v1651 = vld [vmem:[%s10 + $0x20] sm:$0xff]
    %v1652 = vld [vmem:[%s10 + $0x28] sm:$0xff]
    %v1653 = vld [vmem:[%s10 + $0x30] sm:$0xff]
    %v1654 = vld [vmem:[%s10 + $0x38] sm:$0xff]
    %v1655 = vld [vmem:[%s10 + $0x40] sm:$0xff]
    %v1656 = vld [vmem:[%s10 + $0x48] sm:$0xff]
    %v1657 = vld [vmem:[%s10 + $0x50] sm:$0xff]
    %v1658 = vld [vmem:[%s10 + $0x58] sm:$0xff]
    %v1659 = vld [vmem:[%s10 + $0x60] sm:$0xff]
    %v1660 = vld [vmem:[%s10 + $0x68] sm:$0xff]
    %v1661 = vld [vmem:[%s10 + $0x70] sm:$0xff]
    %v1662 = vld [vmem:[%s10 + $0x78] sm:$0xff]
    %v1663 = vld [vmem:[%s10 + $0x80] sm:$0xff]
    %v1664 = vld [vmem:[%s10 + $0x88] sm:$0xff]
    %v1665 = vld [vmem:[%s10 + $0x90] sm:$0xff]
    %v1666 = vld [vmem:[%s10 + $0x98] sm:$0xff]
    %v1667 = vld [vmem:[%s10 + $0xa0] sm:$0xff]
    %v1668 = vld [vmem:[%s10 + $0xa8] sm:$0xff]
    %v1669 = vld [vmem:[%s10 + $0xb0] sm:$0xff]
    %v1670 = vld [vmem:[%s10 + $0xb8] sm:$0xff]
    %v1671 = vld [vmem:[%s10 + $0xc0] sm:$0xff]
    %v1672 = vld [vmem:[%s10 + $0xc8] sm:$0xff]
    %v1673 = vld [vmem:[%s10 + $0xd0] sm:$0xff]
    %v1674 = vld [vmem:[%s10 + $0xd8] sm:$0xff]
    %v1675 = vld [vmem:[%s10 + $0xe0] sm:$0xff]
    %v1676 = vld [vmem:[%s10 + $0xe8] sm:$0xff]
    %v1677 = vld [vmem:[%s10 + $0xf0] sm:$0xff]
    %v1678 = vld [vmem:[%s10 + $0xf8] sm:$0xff]
    %v1711 = vunpack.c.l.b16 %v1647
    %v1712 = vunpack.c.h.b16 %v1647
    %v1713 = vunpack.c.l.b16 %v1648
    %v1714 = vunpack.c.h.b16 %v1648
    %v1715 = vunpack.c.l.b16 %v1649
    %v1716 = vunpack.c.h.b16 %v1649
    %v1717 = vunpack.c.l.b16 %v1650
    %v1718 = vunpack.c.h.b16 %v1650
    %v1719 = vunpack.c.l.b16 %v1651
    %v1720 = vunpack.c.h.b16 %v1651
    %v1721 = vunpack.c.l.b16 %v1652
    %v1722 = vunpack.c.h.b16 %v1652
    %v1723 = vunpack.c.l.b16 %v1653
    %v1724 = vunpack.c.h.b16 %v1653
    %v1725 = vunpack.c.l.b16 %v1654
    %v1726 = vunpack.c.h.b16 %v1654
    %v1727 = vunpack.c.l.b16 %v1655
    %v1728 = vunpack.c.h.b16 %v1655
    %v1729 = vunpack.c.l.b16 %v1656
    %v1730 = vunpack.c.h.b16 %v1656
    %v1731 = vunpack.c.l.b16 %v1657
    %v1732 = vunpack.c.h.b16 %v1657
    %v1733 = vunpack.c.l.b16 %v1658
    %v1734 = vunpack.c.h.b16 %v1658
    %v1735 = vunpack.c.l.b16 %v1659
    %v1736 = vunpack.c.h.b16 %v1659
    %v1737 = vunpack.c.l.b16 %v1660
    %v1738 = vunpack.c.h.b16 %v1660
    %v1739 = vunpack.c.l.b16 %v1661
    %v1740 = vunpack.c.h.b16 %v1661
    %v1741 = vunpack.c.l.b16 %v1662
    %v1742 = vunpack.c.h.b16 %v1662
    %v1743 = vunpack.c.l.b16 %v1663
    %v1744 = vunpack.c.h.b16 %v1663
    %v1745 = vunpack.c.l.b16 %v1664
    %v1746 = vunpack.c.h.b16 %v1664
    %v1747 = vunpack.c.l.b16 %v1665
    %v1748 = vunpack.c.h.b16 %v1665
    %v1749 = vunpack.c.l.b16 %v1666
    %v1750 = vunpack.c.h.b16 %v1666
    %v1751 = vunpack.c.l.b16 %v1667
    %v1752 = vunpack.c.h.b16 %v1667
    %v1753 = vunpack.c.l.b16 %v1668
    %v1754 = vunpack.c.h.b16 %v1668
    %v1755 = vunpack.c.l.b16 %v1669
    %v1756 = vunpack.c.h.b16 %v1669
    %v1757 = vunpack.c.l.b16 %v1670
    %v1758 = vunpack.c.h.b16 %v1670
    %v1759 = vunpack.c.l.b16 %v1671
    %v1760 = vunpack.c.h.b16 %v1671
    %v1761 = vunpack.c.l.b16 %v1672
    %v1762 = vunpack.c.h.b16 %v1672
    %v1763 = vunpack.c.l.b16 %v1673
    %v1764 = vunpack.c.h.b16 %v1673
    %v1765 = vunpack.c.l.b16 %v1674
    %v1766 = vunpack.c.h.b16 %v1674
    %v1767 = vunpack.c.l.b16 %v1675
    %v1768 = vunpack.c.h.b16 %v1675
    %v1769 = vunpack.c.l.b16 %v1676
    %v1770 = vunpack.c.h.b16 %v1676
    %v1771 = vunpack.c.l.b16 %v1677
    %v1772 = vunpack.c.h.b16 %v1677
    %v1773 = vunpack.c.l.b16 %v1678
    %v1774 = vunpack.c.h.b16 %v1678
    %v1775 = vpack.c.b16 %v1715, %v1711
    %v1776 = vpack.c.b16 %v1716, %v1712
    %v1777 = vpack.c.b16 %v1717, %v1713
    %v1778 = vpack.c.b16 %v1718, %v1714
    %v1779 = vpack.c.b16 %v1723, %v1719
    %v1780 = vpack.c.b16 %v1724, %v1720
    %v1781 = vpack.c.b16 %v1725, %v1721
    %v1782 = vpack.c.b16 %v1726, %v1722
    %v1783 = vpack.c.b16 %v1731, %v1727
    %v1784 = vpack.c.b16 %v1732, %v1728
    %v1785 = vpack.c.b16 %v1733, %v1729
    %v1786 = vpack.c.b16 %v1734, %v1730
    %v1787 = vpack.c.b16 %v1739, %v1735
    %v1788 = vpack.c.b16 %v1740, %v1736
    %v1789 = vpack.c.b16 %v1741, %v1737
    %v1790 = vpack.c.b16 %v1742, %v1738
    %v1791 = vpack.c.b16 %v1747, %v1743
    %v1792 = vpack.c.b16 %v1748, %v1744
    %v1793 = vpack.c.b16 %v1749, %v1745
    %v1794 = vpack.c.b16 %v1750, %v1746
    %v1795 = vpack.c.b16 %v1755, %v1751
    %v1796 = vpack.c.b16 %v1756, %v1752
    %v1797 = vpack.c.b16 %v1757, %v1753
    %v1798 = vpack.c.b16 %v1758, %v1754
    %v1799 = vpack.c.b16 %v1763, %v1759
    %v1800 = vpack.c.b16 %v1764, %v1760
    %v1801 = vpack.c.b16 %v1765, %v1761
    %v1802 = vpack.c.b16 %v1766, %v1762
    %v1803 = vpack.c.b16 %v1771, %v1767
    %v1804 = vpack.c.b16 %v1772, %v1768
    %v1805 = vpack.c.b16 %v1773, %v1769
    %v1806 = vpack.c.b16 %v1774, %v1770
    %1839 = vmatprep.subr.bf16.mxu0 %v1776
    %1840 = vmatpush1.bf16.msra.mxu0 %v1775
    %1841 = vmatprep.subr.bf16.mxu0 %v1780
    %1842 = vmatpush1.bf16.msra.mxu0 %v1779
    %1843 = vmatprep.subr.bf16.mxu0 %v1784
    %1844 = vmatpush1.bf16.msra.mxu0 %v1783
    %1845 = vmatprep.subr.bf16.mxu0 %v1788
    %1846 = vmatpush1.bf16.msra.mxu0 %v1787
    %1847 = vmatprep.subr.bf16.mxu0 %v1792
    %1848 = vmatpush1.bf16.msra.mxu0 %v1791
    %1849 = vmatprep.subr.bf16.mxu0 %v1796
    %1850 = vmatpush1.bf16.msra.mxu0 %v1795
    %1851 = vmatprep.subr.bf16.mxu0 %v1800
    %1852 = vmatpush1.bf16.msra.mxu0 %v1799
    %1853 = vmatprep.subr.bf16.mxu0 %v1804
    %1854 = vmatpush1.bf16.msra.mxu0 %v1803
    %1855 = vmatprep.subr.bf16.mxu0 0
    %1856 = vmatpush1.bf16.msra.mxu0 0
    %1857 = vmatprep.subr.bf16.mxu0 0
    %1858 = vmatpush1.bf16.msra.mxu0 0
    %1859 = vmatprep.subr.bf16.mxu0 0
    %1860 = vmatpush1.bf16.msra.mxu0 0
    %1861 = vmatprep.subr.bf16.mxu0 0
    %1862 = vmatpush1.bf16.msra.mxu0 0
    %1863 = vmatprep.subr.bf16.mxu0 0
    %1864 = vmatpush1.bf16.msra.mxu0 0
    %1865 = vmatprep.subr.bf16.mxu0 0
    %1866 = vmatpush1.bf16.msra.mxu0 0
    %1867 = vmatprep.subr.bf16.mxu0 0
    %1868 = vmatpush1.bf16.msra.mxu0 0
    %1869 = vmatprep.subr.bf16.mxu0 0
    %1870 = vmatpush1.bf16.msra.mxu0 0
    %1871 = vmatprep.mubr.bf16.mxu0 0
    %1872 = vmatmul.mubr.bf16.gmra.mrb[0].mxu0 %v381
    %v1873 = vpop.f32.mrb[0].mxu0
    %v1874 = vadd.f32 0.0, %v1873
    %v1875 = vpop.f32.mrb[0].mxu0
    %v1876 = vadd.f32 0.0, %v1875
    %v1877 = vpop.f32.mrb[0].mxu0
    %v1878 = vpop.f32.mrb[0].mxu0
    %1879 = vdwg.mxu0
    %1880 = vmatprep.subr.bf16.mxu0 %v1778
    %1881 = vmatpush1.bf16.msra.mxu0 %v1777
    %1882 = vmatprep.subr.bf16.mxu0 %v1782
    %1883 = vmatpush1.bf16.msra.mxu0 %v1781
    %1884 = vmatprep.subr.bf16.mxu0 %v1786
    %1885 = vmatpush1.bf16.msra.mxu0 %v1785
    %1886 = vmatprep.subr.bf16.mxu0 %v1790
    %1887 = vmatpush1.bf16.msra.mxu0 %v1789
    %1888 = vmatprep.subr.bf16.mxu0 %v1794
    %1889 = vmatpush1.bf16.msra.mxu0 %v1793
    %1890 = vmatprep.subr.bf16.mxu0 %v1798
    %1891 = vmatpush1.bf16.msra.mxu0 %v1797
    %1892 = vmatprep.subr.bf16.mxu0 %v1802
    %1893 = vmatpush1.bf16.msra.mxu0 %v1801
    %1894 = vmatprep.subr.bf16.mxu0 %v1806
    %1895 = vmatpush1.bf16.msra.mxu0 %v1805
    %1896 = vmatprep.subr.bf16.mxu0 0
    %1897 = vmatpush1.bf16.msra.mxu0 0
    %1898 = vmatprep.subr.bf16.mxu0 0
    %1899 = vmatpush1.bf16.msra.mxu0 0
    %1900 = vmatprep.subr.bf16.mxu0 0
    %1901 = vmatpush1.bf16.msra.mxu0 0
    %1902 = vmatprep.subr.bf16.mxu0 0
    %1903 = vmatpush1.bf16.msra.mxu0 0
    %1904 = vmatprep.subr.bf16.mxu0 0
    %1905 = vmatpush1.bf16.msra.mxu0 0
    %1906 = vmatprep.subr.bf16.mxu0 0
    %1907 = vmatpush1.bf16.msra.mxu0 0
    %1908 = vmatprep.subr.bf16.mxu0 0
    %1909 = vmatpush1.bf16.msra.mxu0 0
    %1910 = vmatprep.subr.bf16.mxu0 0
    %1911 = vmatpush1.bf16.msra.mxu0 0
    %1912 = vmatprep.mubr.bf16.mxu0 0
    %1913 = vmatmul.mubr.bf16.gmra.mrb[0].mxu0 %v381
    %v1914 = vpop.f32.mrb[0].mxu0
    %v1915 = vadd.f32 0.0, %v1914
    %v1916 = vpop.f32.mrb[0].mxu0
    %v1917 = vadd.f32 0.0, %v1916
    %v1918 = vpop.f32.mrb[0].mxu0
    %v1919 = vpop.f32.mrb[0].mxu0
    %1920 = vdwg.mxu0
    %v1921 = vadd.f32 %v1600, %v1874
    %v1922 = vadd.f32 %v1602, %v1876
    %v1923 = vadd.f32 %v1641, %v1915
    %v1924 = vadd.f32 %v1643, %v1917
    %v1925 = vld [vmem:[#allocation8] sm:$0xf]
    %v1927 = vlaneseq
    %v1928 = vshrl.u32 %v1927, 7
    %v1929 = vsub.s32 0, %v1928
    %v1930 = vrot.slane %v1925, %v1929
    %v1931 = vlaneseq
    %v1932 = vshrl.u32 %v1931, 7
    %v1933 = vsub.s32 1, %v1932
    %v1934 = vrot.slane %v1925, %v1933
    %v1935 = vlaneseq
    %v1936 = vshrl.u32 %v1935, 7
    %v1937 = vsub.s32 2, %v1936
    %v1938 = vrot.slane %v1925, %v1937
    %v1939 = vlaneseq
    %v1940 = vshrl.u32 %v1939, 7
    %v1941 = vsub.s32 3, %v1940
    %v1942 = vrot.slane %v1925, %v1941
    %v1947 = vadd.f32 %v1921, %v1930
    %v1948 = vadd.f32 %v1922, %v1934
    %v1949 = vadd.f32 %v1923, %v1938
    %v1950 = vadd.f32 %v1924, %v1942
    %v1951 = vxor.u32 %v1947, 2147483648
    %v1952 = vmul.f32 %v1951, 1.442695
    %v1953 = vpow.pop %v1952
    %v1954 = vadd.f32 %v1953, 1.0
    %v1955 = vrcp.pop %v1954
    %v1956 = vmul.f32 1.0, %v1955
    %v1957 = vxor.u32 %v1948, 2147483648
    %v1958 = vmul.f32 %v1957, 1.442695
    %v1959 = vpow.pop %v1958
    %v1960 = vadd.f32 %v1959, 1.0
    %v1961 = vrcp.pop %v1960
    %v1962 = vmul.f32 1.0, %v1961
    %v1963 = vtanh.pop %v1949
    %v1964 = vxor.u32 %v1950, 2147483648
    %v1965 = vmul.f32 %v1964, 1.442695
    %v1966 = vpow.pop %v1965
    %v1967 = vadd.f32 %v1966, 1.0
    %v1968 = vrcp.pop %v1967
    %v1969 = vmul.f32 1.0, %v1968
    %v1970 = vmul.f32 %v1962, %v380
    %v1971 = vmul.f32 %v1956, %v1963
    %v1972 = vadd.f32 %v1970, %v1971
    %v1973 = vtanh.pop %v1972
    %v1974 = vmul.f32 %v1969, %v1973
    %v1975 = vpack.c.bf16 %v1974, %v1974
    %v1976 = vld [vmem:[%s12] sm:$0xf]
    %v1977 = vld [vmem:[%s12 + $0x4] sm:$0xf]
    %v1978 = vld [vmem:[%s12 + $0x8] sm:$0xf]
    %v1979 = vld [vmem:[%s12 + $0xc] sm:$0xf]
    %v1980 = vld [vmem:[%s12 + $0x10] sm:$0xf]
    %v1981 = vld [vmem:[%s12 + $0x14] sm:$0xf]
    %v1982 = vld [vmem:[%s12 + $0x18] sm:$0xf]
    %v1983 = vld [vmem:[%s12 + $0x1c] sm:$0xf]
    %v1984 = vld [vmem:[%s12 + $0x20] sm:$0xf]
    %v1985 = vld [vmem:[%s12 + $0x24] sm:$0xf]
    %v1986 = vld [vmem:[%s12 + $0x28] sm:$0xf]
    %v1987 = vld [vmem:[%s12 + $0x2c] sm:$0xf]
    %v1988 = vld [vmem:[%s12 + $0x30] sm:$0xf]
    %v1989 = vld [vmem:[%s12 + $0x34] sm:$0xf]
    %v1990 = vld [vmem:[%s12 + $0x38] sm:$0xf]
    %v1991 = vld [vmem:[%s12 + $0x3c] sm:$0xf]
    %v1992 = vld [vmem:[#allocation10] sm:$0x1]
    %v1994 = vlaneseq
    %v1995 = vshrl.u32 %v1994, 7
    %v1996 = vsub.s32 0, %v1995
    %v1997 = vrot.slane %v1992, %v1996
    %v2015 = vunpack.c.l.b16 %v1976
    %v2016 = vunpack.c.l.b16 %v1977
    %v2017 = vunpack.c.l.b16 %v1978
    %v2018 = vunpack.c.l.b16 %v1979
    %v2019 = vunpack.c.l.b16 %v1980
    %v2020 = vunpack.c.l.b16 %v1981
    %v2021 = vunpack.c.l.b16 %v1982
    %v2022 = vunpack.c.l.b16 %v1983
    %v2023 = vunpack.c.l.b16 %v1984
    %v2024 = vunpack.c.l.b16 %v1985
    %v2025 = vunpack.c.l.b16 %v1986
    %v2026 = vunpack.c.l.b16 %v1987
    %v2027 = vunpack.c.l.b16 %v1988
    %v2028 = vunpack.c.l.b16 %v1989
    %v2029 = vunpack.c.l.b16 %v1990
    %v2030 = vunpack.c.l.b16 %v1991
    %v2031 = vpack.c.b16 %v2016, %v2015
    %v2032 = vpack.c.b16 %v2018, %v2017
    %v2033 = vpack.c.b16 %v2020, %v2019
    %v2034 = vpack.c.b16 %v2022, %v2021
    %v2035 = vpack.c.b16 %v2024, %v2023
    %v2036 = vpack.c.b16 %v2026, %v2025
    %v2037 = vpack.c.b16 %v2028, %v2027
    %v2038 = vpack.c.b16 %v2030, %v2029
    %2047 = vmatprep.subr.bf16.mxu0 0
    %2048 = vmatpush1.bf16.msra.mxu0 %v2031
    %2049 = vmatprep.subr.bf16.mxu0 0
    %2050 = vmatpush1.bf16.msra.mxu0 %v2032
    %2051 = vmatprep.subr.bf16.mxu0 0
    %2052 = vmatpush1.bf16.msra.mxu0 %v2033
    %2053 = vmatprep.subr.bf16.mxu0 0
    %2054 = vmatpush1.bf16.msra.mxu0 %v2034
    %2055 = vmatprep.subr.bf16.mxu0 0
    %2056 = vmatpush1.bf16.msra.mxu0 %v2035
    %2057 = vmatprep.subr.bf16.mxu0 0
    %2058 = vmatpush1.bf16.msra.mxu0 %v2036
    %2059 = vmatprep.subr.bf16.mxu0 0
    %2060 = vmatpush1.bf16.msra.mxu0 %v2037
    %2061 = vmatprep.subr.bf16.mxu0 0
    %2062 = vmatpush1.bf16.msra.mxu0 %v2038
    %2063 = vmatprep.subr.bf16.mxu0 0
    %2064 = vmatpush1.bf16.msra.mxu0 0
    %2065 = vmatprep.subr.bf16.mxu0 0
    %2066 = vmatpush1.bf16.msra.mxu0 0
    %2067 = vmatprep.subr.bf16.mxu0 0
    %2068 = vmatpush1.bf16.msra.mxu0 0
    %2069 = vmatprep.subr.bf16.mxu0 0
    %2070 = vmatpush1.bf16.msra.mxu0 0
    %2071 = vmatprep.subr.bf16.mxu0 0
    %2072 = vmatpush1.bf16.msra.mxu0 0
    %2073 = vmatprep.subr.bf16.mxu0 0
    %2074 = vmatpush1.bf16.msra.mxu0 0
    %2075 = vmatprep.subr.bf16.mxu0 0
    %2076 = vmatpush1.bf16.msra.mxu0 0
    %2077 = vmatprep.subr.bf16.mxu0 0
    %2078 = vmatpush1.bf16.msra.mxu0 0
    %2079 = vmatprep.mubr.bf16.mxu0 0
    %2080 = vmatmul.mubr.bf16.gmra.mrb[0].mxu0 %v1975
    %v2081 = vpop.f32.mrb[0].mxu0
    %v2082 = vadd.f32 %v1997, %v2081
    %v2083 = vpop.f32.mrb[0].mxu0
    %v2084 = vpop.f32.mrb[0].mxu0
    %v2085 = vpop.f32.mrb[0].mxu0
    %2086 = vdwg.mxu0
    %2087 = vst [vmem:[%s14] sm:$0xff] %v2082
    %2088 = vst [vmem:[#allocation2] sm:$0xff] %v1974
    %2089 = vst [vmem:[#allocation3] sm:$0xff] %v1972
    // Predicated region
    $region74: #{decoder_decode.1} parent=1 // pred_check
      %p2090 = pneg %p86
    $region75: #{decoder_decode.1} parent=1 // pred_check_branch
      %2092 = sbr.rel (%p2090) target = $region77
    $region76: #{decoder_decode.1} parent=1 // pred_region
      %2093 = vst [vmem:[%s15] sm:$0xff] %v1974
      %2094 = vst [vmem:[%s16] sm:$0xff] %v1972
    $region77: #{decoder_decode.1} parent=1 // pred_fallthru
      _
    // Predicated region
    $region78: #{decoder_decode.1} parent=1 // pred_check
      _
    $region79: #{decoder_decode.1} parent=1 // pred_check_branch
      %2096 = sbr.rel (0) target = $region81
    $region80: #{decoder_decode.1} parent=1 // pred_region
      _
    $region81: #{decoder_decode.1} parent=1 // pred_fallthru
      _
    // Predicated region
    $region82: #{decoder_decode.1} parent=1 // pred_check
      _
    $region83: #{decoder_decode.1} parent=1 // pred_check_branch
      %2098 = sbr.rel (0) target = $region85
    $region84: #{decoder_decode.1} parent=1 // pred_region
      _
    $region85: #{decoder_decode.1} parent=1 // pred_fallthru
      _
    // Predicated region
    $region86: #{decoder_decode.1} parent=1 // pred_check
      _
    $region87: #{decoder_decode.1} parent=1 // pred_check_branch
      %2100 = sbr.rel (0) target = $region89
    $region88: #{decoder_decode.1} parent=1 // pred_region
      _
    $region89: #{decoder_decode.1} parent=1 // pred_fallthru
      _
    // Predicated region
    $region90: #{decoder_decode.1} parent=1 // pred_check
      _
    $region91: #{decoder_decode.1} parent=1 // pred_check_branch
      %2102 = sbr.rel (0) target = $region93
    $region92: #{decoder_decode.1} parent=1 // pred_region
      _
    $region93: #{decoder_decode.1} parent=1 // pred_fallthru
      _
    // Predicated region
    $region94: #{decoder_decode.1} parent=1 // pred_check
      _
    $region95: #{decoder_decode.1} parent=1 // pred_check_branch
      %2104 = sbr.rel (0) target = $region97
    $region96: #{decoder_decode.1} parent=1 // pred_region
      _
    $region97: #{decoder_decode.1} parent=1 // pred_fallthru
      _
    // Predicated region
    $region98: #{decoder_decode.1} parent=1 // pred_check
      _
    $region99: #{decoder_decode.1} parent=1 // pred_check_branch
      %2106 = sbr.rel (0) target = $region101
    $region100: #{decoder_decode.1} parent=1 // pred_region
      _
    $region101: #{decoder_decode.1} parent=1 // pred_fallthru
      _
    %2107 = vsyncpa [#allocation7], 1
    %2108 = vsyncpa [#allocation9], 1

</llo_original>
